<compile_context>
chip_gen: v5e
topology: v5e:2x2
jax: 0.10.0
libtpu: 0.0.40
codegen_flags: <defaults>
</compile_context>

<pallas_src>
import functools

import jax
import jax.numpy as jnp
from jax.experimental import pallas as pl
from jax.experimental.pallas import tpu as pltpu


def attention_kernel(x_ref, wqkv_ref, bqkv_ref, wout_ref, o_ref, *,
                     heads, dim_head, eps):
    bB, N, D = x_ref.shape
    inner = heads * dim_head

    # ---- LayerNorm over features (f32); gamma/beta are folded into the
    # ---- fused QKV weight / bias, so only the normalization remains. ------
    x = x_ref[...].astype(jnp.float32).reshape(bB * N, D)
    mean = jnp.mean(x, axis=-1, keepdims=True)
    var = jnp.mean((x - mean) ** 2, axis=-1, keepdims=True)
    xn = (x - mean) * jax.lax.rsqrt(var + eps)

    # ---- Fused QKV projection: one wide MXU push over all bB*N rows -------
    # bf16 operands, f32 accumulation; softmax scale pre-folded into Q cols.
    qkv = jnp.dot(xn.astype(jnp.bfloat16), wqkv_ref[...],
                  preferred_element_type=jnp.float32) + bqkv_ref[...]

    # Output-projection weight: bf16 in HBM, cast once (hoisted out of loop).
    wout = wout_ref[...].astype(jnp.float32)

    # Static unroll over batch elements in this block (bB is 1 or B).
    for b in range(bB):
        rows = qkv[b * N:(b + 1) * N]                      # (N, 3*inner)

        def heads_view(t):                                 # (N, inner) -> (H, N, dh)
            return jnp.transpose(t.reshape(N, heads, dim_head), (1, 0, 2))

        q = heads_view(rows[:, 0 * inner:1 * inner])       # scale pre-folded
        k = heads_view(rows[:, 1 * inner:2 * inner])
        v = heads_view(rows[:, 2 * inner:3 * inner])

        # ---- Scaled-dot-product attention, batched over heads (f32) -------
        s = jnp.einsum('hnd,hmd->hnm', q, k,
                       preferred_element_type=jnp.float32)  # (H, N, N)
        s = s - jnp.max(s, axis=-1, keepdims=True)
        p = jnp.exp(s)
        p = p * pl.reciprocal(jnp.sum(p, axis=-1, keepdims=True), approx=True)

        o_h = jnp.einsum('hnm,hmd->hnd', p, v,
                         preferred_element_type=jnp.float32)  # (H, N, dh)

        # ---- Head reduction folded into a single output projection --------
        o_flat = jnp.transpose(o_h, (1, 0, 2)).reshape(N, inner)  # (N, inner)
        out_b = jnp.dot(o_flat, wout, preferred_element_type=jnp.float32)
        o_ref[b] = out_b.astype(o_ref.dtype)


def _is_multi_tensorcore_chip():
    """True on chips with >1 TensorCore (v7x), where a size-B parallel grid
    axis is the only core-level parallelism available at these shapes."""
    try:
        kind = jax.devices()[0].device_kind.lower()
    except Exception:
        return False
    return "7" in kind


def attention_forward(x, gamma, beta, w_qkv, w_out, *, heads, dim_head,
                      eps=1e-5, grid_over_batch=None):
    """x: (B, N, D); gamma/beta: (D,); w_qkv: (D, 3*inner); w_out: (inner, D)."""
    B, N, D = x.shape
    inner = heads * dim_head
    scale = dim_head ** -0.5

    if grid_over_batch is None:
        grid_over_batch = _is_multi_tensorcore_chip()
    bB = 1 if grid_over_batch else B          # batch elements per grid step
    grid = (B // bB,)

    # ---- Trace-time weight prep (outside the kernel) -----------------------
    # Fold LayerNorm affine into the QKV projection (exact: Linear has no
    # bias):  LN(x) @ W = xhat @ (diag(gamma) @ W) + beta @ W.
    # Fold the softmax scale into the Q columns (and the Q bias slice).
    gamma_f = gamma.reshape(D).astype(jnp.float32)
    beta_f = beta.reshape(D).astype(jnp.float32)
    w_qkv_f = w_qkv.astype(jnp.float32)
    col_scale = jnp.concatenate([jnp.full((inner,), scale, jnp.float32),
                                 jnp.ones((2 * inner,), jnp.float32)])
    w_eff = (gamma_f[:, None] * w_qkv_f) * col_scale[None, :]   # (D, 3*inner)
    b_eff = (beta_f @ w_qkv_f) * col_scale                       # (3*inner,)

    wqkv_bf16 = w_eff.astype(jnp.bfloat16)          # HBM weights in bf16
    bqkv_f32 = b_eff.reshape(1, 3 * inner)          # bias stays f32 (post-acc add)
    wout_bf16 = w_out.astype(jnp.bfloat16)

    kernel = functools.partial(attention_kernel, heads=heads,
                               dim_head=dim_head, eps=eps)
    return pl.pallas_call(
        kernel,
        out_shape=jax.ShapeDtypeStruct((B, N, D), x.dtype),
        grid_spec=pltpu.PrefetchScalarGridSpec(
            num_scalar_prefetch=0,
            grid=grid,
            in_specs=[
                pl.BlockSpec((bB, N, D), lambda b: (b, 0, 0)),
                pl.BlockSpec((D, 3 * inner), lambda b: (0, 0)),
                pl.BlockSpec((1, 3 * inner), lambda b: (0, 0)),
                pl.BlockSpec((inner, D), lambda b: (0, 0)),
            ],
            out_specs=pl.BlockSpec((bB, N, D), lambda b: (b, 0, 0)),
        ),
        compiler_params=pltpu.CompilerParams(
            dimension_semantics=("parallel",)),
    )(x, wqkv_bf16, bqkv_f32, wout_bf16)


def attention_reference(x, gamma, beta, w_qkv, w_out, *, heads, dim_head,
                        eps=1e-5):
    """Pure-JAX f32 reference matching the PyTorch module semantics."""
    B, N, D = x.shape
    inner = heads * dim_head
    mean = jnp.mean(x, axis=-1, keepdims=True)
    var = jnp.mean((x - mean) ** 2, axis=-1, keepdims=True)
    xn = (x - mean) / jnp.sqrt(var + eps) * gamma + beta
    qkv = xn @ w_qkv
    q, k, v = jnp.split(qkv, 3, axis=-1)

    def to_heads(t):
        return t.reshape(B, N, heads, dim_head).transpose(0, 2, 1, 3)

    q, k, v = map(to_heads, (q, k, v))
    s = jnp.einsum('bhnd,bhmd->bhnm', q, k) * (dim_head ** -0.5)
    p = jax.nn.softmax(s, axis=-1)
    o = jnp.einsum('bhnm,bhmd->bhnd', p, v)
    o = o.transpose(0, 2, 1, 3).reshape(B, N, inner)
    return o @ w_out


if __name__ == "__main__":
    # Small shapes consistent with the module.
    B, N, D = 2, 8, 32
    heads, dim_head = 4, 16
    inner = heads * dim_head

    key = jax.random.PRNGKey(0)
    k_x, k_qkv, k_out, k_g, k_b = jax.random.split(key, 5)

    x = jax.random.normal(k_x, (B, N, D), dtype=jnp.float32)
    # LayerNorm params (randomized slightly so the gamma/beta folding is
    # actually exercised; PyTorch default init would be ones / zeros).
    gamma = 1.0 + 0.1 * jax.random.normal(k_g, (D,), dtype=jnp.float32)
    beta = 0.1 * jax.random.normal(k_b, (D,), dtype=jnp.float32)
    # Linear weights, stored as (in_features, out_features).
    w_qkv = 0.05 * jax.random.normal(k_qkv, (D, 3 * inner), dtype=jnp.float32)
    w_out = 0.05 * jax.random.normal(k_out, (inner, D), dtype=jnp.float32)

    out = attention_forward(x, gamma, beta, w_qkv, w_out,
                            heads=heads, dim_head=dim_head)
    out = jax.block_until_ready(out)

    ref = attention_reference(x, gamma, beta, w_qkv, w_out,
                              heads=heads, dim_head=dim_head)
    assert out.shape == (B, N, D)
    # Tolerance covers bf16 HBM weights + bf16 activation cast in the QKV
    # matmul and the approx EUP reciprocal; all other math is f32.
    assert jnp.allclose(out, ref, atol=2e-2, rtol=2e-2), "mismatch vs reference"

    print("KERNEL_OK")
</pallas_src>

<mosaic_0001>
module attributes {stable_mosaic.version = 11 : i64} {
  func.func @attention_kernel(%arg0: i32, %arg1: memref<2x8x32xf32, #tpu.memory_space<vmem>>, %arg2: memref<32x192xbf16, #tpu.memory_space<vmem>>, %arg3: memref<1x192xf32, #tpu.memory_space<vmem>>, %arg4: memref<64x32xbf16, #tpu.memory_space<vmem>>, %arg5: memref<2x8x32xf32, #tpu.memory_space<vmem>>) attributes {dimension_semantics = [#tpu.dimension_semantics<parallel>], iteration_bounds = array<i64: 1>, scalar_prefetch = 0 : i64, scratch_operands = 0 : i64, tpu.core_type = #tpu.core_type<tc>, window_params = [{transform_indices = @transform_0, window_bounds = array<i64: 2, 8, 32>}, {pipeline_mode = #tpu.pipeline_mode<synchronous>, transform_indices = @transform_1, window_bounds = array<i64: 32, 192>}, {pipeline_mode = #tpu.pipeline_mode<synchronous>, transform_indices = @transform_2, window_bounds = array<i64: 1, 192>}, {pipeline_mode = #tpu.pipeline_mode<synchronous>, transform_indices = @transform_3, window_bounds = array<i64: 64, 32>}, {transform_indices = @transform_4, window_bounds = array<i64: 2, 8, 32>}]} {
    %c0 = arith.constant 0 : index
    %c0_0 = arith.constant 0 : index
    %c0_1 = arith.constant 0 : index
    %0 = vector.load %arg1[%c0, %c0_0, %c0_1] : memref<2x8x32xf32, #tpu.memory_space<vmem>>, vector<2x8x32xf32>
    %1 = vector.shape_cast %0 : vector<2x8x32xf32> to vector<16x32xf32>
    %cst = arith.constant dense<0.000000e+00> : vector<16xf32>
    %2 = vector.multi_reduction <add>, %1, %cst [1] : vector<16x32xf32> to vector<16xf32>
    %3 = vector.shape_cast %2 : vector<16xf32> to vector<16x1xf32>
    %cst_2 = arith.constant 3.200000e+01 : f32
    %4 = vector.broadcast %cst_2 : f32 to vector<16x1xf32>
    %5 = arith.divf %3, %4 : vector<16x1xf32>
    %6 = vector.broadcast %5 : vector<16x1xf32> to vector<16x32xf32>
    %7 = arith.subf %1, %6 : vector<16x32xf32>
    %8 = arith.mulf %7, %7 : vector<16x32xf32>
    %cst_3 = arith.constant dense<0.000000e+00> : vector<16xf32>
    %9 = vector.multi_reduction <add>, %8, %cst_3 [1] : vector<16x32xf32> to vector<16xf32>
    %10 = vector.shape_cast %9 : vector<16xf32> to vector<16x1xf32>
    %cst_4 = arith.constant 3.200000e+01 : f32
    %11 = vector.broadcast %cst_4 : f32 to vector<16x1xf32>
    %12 = arith.divf %10, %11 : vector<16x1xf32>
    %13 = vector.broadcast %5 : vector<16x1xf32> to vector<16x32xf32>
    %14 = arith.subf %1, %13 : vector<16x32xf32>
    %cst_5 = arith.constant 9.99999974E-6 : f32
    %15 = vector.broadcast %cst_5 : f32 to vector<16x1xf32>
    %16 = arith.addf %12, %15 : vector<16x1xf32>
    %17 = math.rsqrt %16 : vector<16x1xf32>
    %18 = vector.broadcast %17 : vector<16x1xf32> to vector<16x32xf32>
    %19 = arith.mulf %14, %18 : vector<16x32xf32>
    %20 = arith.truncf %19 : vector<16x32xf32> to vector<16x32xbf16>
    %c0_6 = arith.constant 0 : index
    %c0_7 = arith.constant 0 : index
    %21 = vector.load %arg2[%c0_6, %c0_7] : memref<32x192xbf16, #tpu.memory_space<vmem>>, vector<32x192xbf16>
    %cst_8 = arith.constant dense<0.000000e+00> : vector<16x192xf32>
    %22 = tpu.matmul %20, %21, %cst_8 {dimension_numbers = #tpu.dot_dimension_numbers<[1], [0], [0], [1], [0, 0, 1, 1], [], []>} : vector<16x32xbf16>, vector<32x192xbf16>, vector<16x192xf32> -> vector<16x192xf32>
    %c0_9 = arith.constant 0 : index
    %c0_10 = arith.constant 0 : index
    %23 = vector.load %arg3[%c0_9, %c0_10] : memref<1x192xf32, #tpu.memory_space<vmem>>, vector<1x192xf32>
    %24 = vector.broadcast %23 : vector<1x192xf32> to vector<16x192xf32>
    %25 = arith.addf %22, %24 : vector<16x192xf32>
    %c0_11 = arith.constant 0 : index
    %c0_12 = arith.constant 0 : index
    %26 = vector.load %arg4[%c0_11, %c0_12] : memref<64x32xbf16, #tpu.memory_space<vmem>>, vector<64x32xbf16>
    %27 = arith.extf %26 : vector<64x32xbf16> to vector<64x32xf32>
    %28 = vector.extract_strided_slice %25 {offsets = [0, 0], sizes = [8, 192], strides = [1, 1]} : vector<16x192xf32> to vector<8x192xf32>
    %29 = vector.extract_strided_slice %28 {offsets = [0, 0], sizes = [8, 64], strides = [1, 1]} : vector<8x192xf32> to vector<8x64xf32>
    %30 = vector.shape_cast %29 : vector<8x64xf32> to vector<8x4x16xf32>
    %31 = tpu.transpose %30, [1, 0, 2] : vector<8x4x16xf32> -> vector<4x8x16xf32>
    %32 = vector.extract_strided_slice %28 {offsets = [0, 64], sizes = [8, 64], strides = [1, 1]} : vector<8x192xf32> to vector<8x64xf32>
    %33 = vector.shape_cast %32 : vector<8x64xf32> to vector<8x4x16xf32>
    %34 = tpu.transpose %33, [1, 0, 2] : vector<8x4x16xf32> -> vector<4x8x16xf32>
    %35 = vector.extract_strided_slice %28 {offsets = [0, 128], sizes = [8, 64], strides = [1, 1]} : vector<8x192xf32> to vector<8x64xf32>
    %36 = vector.shape_cast %35 : vector<8x64xf32> to vector<8x4x16xf32>
    %37 = tpu.transpose %36, [1, 0, 2] : vector<8x4x16xf32> -> vector<4x8x16xf32>
    "tpu.trace_start"() <{level = 10 : i32, message = "hnd,hmd->hnm"}> : () -> ()
    %cst_13 = arith.constant dense<0.000000e+00> : vector<4x8x8xf32>
    %38 = tpu.matmul %31, %34, %cst_13 {dimension_numbers = #tpu.dot_dimension_numbers<[2], [2], [1], [1], [0, 0, 0, 1, 1, 1], [0], [0]>} : vector<4x8x16xf32>, vector<4x8x16xf32>, vector<4x8x8xf32> -> vector<4x8x8xf32>
    "tpu.trace_stop"() : () -> ()
    %cst_14 = arith.constant dense<0xFF800000> : vector<4x8xf32>
    %39 = vector.multi_reduction <maximumf>, %38, %cst_14 [2] : vector<4x8x8xf32> to vector<4x8xf32>
    %40 = vector.shape_cast %39 : vector<4x8xf32> to vector<4x8x1xf32>
    %41 = vector.broadcast %40 : vector<4x8x1xf32> to vector<4x8x8xf32>
    %42 = arith.subf %38, %41 : vector<4x8x8xf32>
    %43 = math.exp %42 : vector<4x8x8xf32>
    %cst_15 = arith.constant dense<0.000000e+00> : vector<4x8xf32>
    %44 = vector.multi_reduction <add>, %43, %cst_15 [2] : vector<4x8x8xf32> to vector<4x8xf32>
    %45 = vector.shape_cast %44 : vector<4x8xf32> to vector<4x8x1xf32>
    %46 = tpu.reciprocal %45 {approx = true} : vector<4x8x1xf32> -> vector<4x8x1xf32>
    %47 = vector.broadcast %46 : vector<4x8x1xf32> to vector<4x8x8xf32>
    %48 = arith.mulf %43, %47 : vector<4x8x8xf32>
    "tpu.trace_start"() <{level = 10 : i32, message = "hnm,hmd->hnd"}> : () -> ()
    %cst_16 = arith.constant dense<0.000000e+00> : vector<4x8x16xf32>
    %49 = tpu.matmul %48, %37, %cst_16 {dimension_numbers = #tpu.dot_dimension_numbers<[2], [1], [1], [2], [0, 0, 0, 1, 1, 2], [0], [0]>} : vector<4x8x8xf32>, vector<4x8x16xf32>, vector<4x8x16xf32> -> vector<4x8x16xf32>
    "tpu.trace_stop"() : () -> ()
    %50 = tpu.transpose %49, [1, 0, 2] : vector<4x8x16xf32> -> vector<8x4x16xf32>
    %51 = vector.shape_cast %50 : vector<8x4x16xf32> to vector<8x64xf32>
    %cst_17 = arith.constant dense<0.000000e+00> : vector<8x32xf32>
    %52 = tpu.matmul %51, %27, %cst_17 {dimension_numbers = #tpu.dot_dimension_numbers<[1], [0], [0], [1], [0, 0, 1, 1], [], []>} : vector<8x64xf32>, vector<64x32xf32>, vector<8x32xf32> -> vector<8x32xf32>
    %c0_18 = arith.constant 0 : index
    %c0_19 = arith.constant 0 : index
    %c0_20 = arith.constant 0 : index
    %53 = vector.load %arg5[%c0_18, %c0_19, %c0_20] : memref<2x8x32xf32, #tpu.memory_space<vmem>>, vector<1x8x32xf32>
    %54 = vector.shape_cast %53 : vector<1x8x32xf32> to vector<8x32xf32>
    %55 = vector.shape_cast %52 : vector<8x32xf32> to vector<1x8x32xf32>
    tpu.vector_store %arg5[%c0_18, %c0_19, %c0_20], %55 {strides = array<i32>} : memref<2x8x32xf32, #tpu.memory_space<vmem>>, vector<1x8x32xf32>,
    %56 = vector.extract_strided_slice %25 {offsets = [8, 0], sizes = [8, 192], strides = [1, 1]} : vector<16x192xf32> to vector<8x192xf32>
    %57 = vector.extract_strided_slice %56 {offsets = [0, 0], sizes = [8, 64], strides = [1, 1]} : vector<8x192xf32> to vector<8x64xf32>
    %58 = vector.shape_cast %57 : vector<8x64xf32> to vector<8x4x16xf32>
    %59 = tpu.transpose %58, [1, 0, 2] : vector<8x4x16xf32> -> vector<4x8x16xf32>
    %60 = vector.extract_strided_slice %56 {offsets = [0, 64], sizes = [8, 64], strides = [1, 1]} : vector<8x192xf32> to vector<8x64xf32>
    %61 = vector.shape_cast %60 : vector<8x64xf32> to vector<8x4x16xf32>
    %62 = tpu.transpose %61, [1, 0, 2] : vector<8x4x16xf32> -> vector<4x8x16xf32>
    %63 = vector.extract_strided_slice %56 {offsets = [0, 128], sizes = [8, 64], strides = [1, 1]} : vector<8x192xf32> to vector<8x64xf32>
    %64 = vector.shape_cast %63 : vector<8x64xf32> to vector<8x4x16xf32>
    %65 = tpu.transpose %64, [1, 0, 2] : vector<8x4x16xf32> -> vector<4x8x16xf32>
    "tpu.trace_start"() <{level = 10 : i32, message = "hnd,hmd->hnm"}> : () -> ()
    %cst_21 = arith.constant dense<0.000000e+00> : vector<4x8x8xf32>
    %66 = tpu.matmul %59, %62, %cst_21 {dimension_numbers = #tpu.dot_dimension_numbers<[2], [2], [1], [1], [0, 0, 0, 1, 1, 1], [0], [0]>} : vector<4x8x16xf32>, vector<4x8x16xf32>, vector<4x8x8xf32> -> vector<4x8x8xf32>
    "tpu.trace_stop"() : () -> ()
    %cst_22 = arith.constant dense<0xFF800000> : vector<4x8xf32>
    %67 = vector.multi_reduction <maximumf>, %66, %cst_22 [2] : vector<4x8x8xf32> to vector<4x8xf32>
    %68 = vector.shape_cast %67 : vector<4x8xf32> to vector<4x8x1xf32>
    %69 = vector.broadcast %68 : vector<4x8x1xf32> to vector<4x8x8xf32>
    %70 = arith.subf %66, %69 : vector<4x8x8xf32>
    %71 = math.exp %70 : vector<4x8x8xf32>
    %cst_23 = arith.constant dense<0.000000e+00> : vector<4x8xf32>
    %72 = vector.multi_reduction <add>, %71, %cst_23 [2] : vector<4x8x8xf32> to vector<4x8xf32>
    %73 = vector.shape_cast %72 : vector<4x8xf32> to vector<4x8x1xf32>
    %74 = tpu.reciprocal %73 {approx = true} : vector<4x8x1xf32> -> vector<4x8x1xf32>
    %75 = vector.broadcast %74 : vector<4x8x1xf32> to vector<4x8x8xf32>
    %76 = arith.mulf %71, %75 : vector<4x8x8xf32>
    "tpu.trace_start"() <{level = 10 : i32, message = "hnm,hmd->hnd"}> : () -> ()
    %cst_24 = arith.constant dense<0.000000e+00> : vector<4x8x16xf32>
    %77 = tpu.matmul %76, %65, %cst_24 {dimension_numbers = #tpu.dot_dimension_numbers<[2], [1], [1], [2], [0, 0, 0, 1, 1, 2], [0], [0]>} : vector<4x8x8xf32>, vector<4x8x16xf32>, vector<4x8x16xf32> -> vector<4x8x16xf32>
    "tpu.trace_stop"() : () -> ()
    %78 = tpu.transpose %77, [1, 0, 2] : vector<4x8x16xf32> -> vector<8x4x16xf32>
    %79 = vector.shape_cast %78 : vector<8x4x16xf32> to vector<8x64xf32>
    %cst_25 = arith.constant dense<0.000000e+00> : vector<8x32xf32>
    %80 = tpu.matmul %79, %27, %cst_25 {dimension_numbers = #tpu.dot_dimension_numbers<[1], [0], [0], [1], [0, 0, 1, 1], [], []>} : vector<8x64xf32>, vector<64x32xf32>, vector<8x32xf32> -> vector<8x32xf32>
    %c1 = arith.constant 1 : index
    %c0_26 = arith.constant 0 : index
    %c0_27 = arith.constant 0 : index
    %81 = vector.load %arg5[%c1, %c0_26, %c0_27] : memref<2x8x32xf32, #tpu.memory_space<vmem>>, vector<1x8x32xf32>
    %82 = vector.shape_cast %81 : vector<1x8x32xf32> to vector<8x32xf32>
    %83 = vector.shape_cast %80 : vector<8x32xf32> to vector<1x8x32xf32>
    tpu.vector_store %arg5[%c1, %c0_26, %c0_27], %83 {strides = array<i32>} : memref<2x8x32xf32, #tpu.memory_space<vmem>>, vector<1x8x32xf32>,
    return
  }
  func.func @transform_0(%arg0: i32) -> (i32, i32, i32) {
    %c0_i32 = arith.constant 0 : i32
    %c0_i32_0 = arith.constant 0 : i32
    %c0_i32_1 = arith.constant 0 : i32
    return %arg0, %c0_i32, %c0_i32_0 : i32, i32, i32
  }
  func.func @transform_1(%arg0: i32) -> (i32, i32) {
    %c0_i32 = arith.constant 0 : i32
    %c0_i32_0 = arith.constant 0 : i32
    %c0_i32_1 = arith.constant 0 : i32
    return %c0_i32, %c0_i32_0 : i32, i32
  }
  func.func @transform_2(%arg0: i32) -> (i32, i32) {
    %c0_i32 = arith.constant 0 : i32
    %c0_i32_0 = arith.constant 0 : i32
    %c0_i32_1 = arith.constant 0 : i32
    return %c0_i32, %c0_i32_0 : i32, i32
  }
  func.func @transform_3(%arg0: i32) -> (i32, i32) {
    %c0_i32 = arith.constant 0 : i32
    %c0_i32_0 = arith.constant 0 : i32
    %c0_i32_1 = arith.constant 0 : i32
    return %c0_i32, %c0_i32_0 : i32, i32
  }
  func.func @transform_4(%arg0: i32) -> (i32, i32, i32) {
    %c0_i32 = arith.constant 0 : i32
    %c0_i32_0 = arith.constant 0 : i32
    %c0_i32_1 = arith.constant 0 : i32
    return %arg0, %c0_i32, %c0_i32_0 : i32, i32, i32
  }
}

</mosaic_0001>

<llo_original>
// kernel: tpu_custom_call.1
$region0: #{tpu_custom_call.1}
  #allocation0 [shape = 'u32[]', space=smem, size = 0x4, offset = 0x4, fixed_abs, tag = 'smem constant byte address 0x4 - core index']
  #allocation1 [shape = 'u32[72,128]{1,0:T(1,128)}', space=vmem, size = 0x9000, scoped, tag = 'internal scratch']
  %s0 = inlined_call_operand.vmem [shape: f32[2,8,32], index: 0, kind: input, shape index: {}]
  %s1 = inlined_call_operand.vmem [shape: bf16[32,192], index: 1, kind: input, shape index: {}]
  %s2 = inlined_call_operand.hbm [shape: f32[1,192], index: 2, kind: input, shape index: {}]
  %s3 = inlined_call_operand.vmem [shape: bf16[64,32], index: 3, kind: input, shape index: {}]
  %s4 = inlined_call_operand.hbm [shape: f32[2,8,32], index: 4, kind: output, shape index: {}]
  %s5 = sld [smem:[#allocation0]]
  $region30: #{tpu_custom_call.1} parent=0
    _
  %s7 = ssub.s32 1, %s5
  %s8 = scalar_select 0, %s7, %s5
  $region1: #{tpu_custom_call.1} parent=0
    #allocation2 [shape = 'u8[1024]{0}', space=vmem, size = 0x400, scoped, tag = 'input window, operand 2, single buffered']
    #allocation3 [shape = 's32[1]{0}', space=sflag, size = 0x4, scoped, tag = 'scoped memory for tpu_custom_call.1']
    #allocation4 [shape = 's32[1]{0}', space=sflag, size = 0x4, scoped, tag = 'scoped memory for tpu_custom_call.1']
    #allocation5 [shape = 'u8[8192]{0}', space=vmem, size = 0x2000, scoped, tag = 'output window, operand 0, single buffered']
    %9 = vsyncpa [#allocation3], 0
    %10 = vsyncpa [#allocation4], 0
    // Predicated region
    $region2: #{tpu_custom_call.1} parent=1 // pred_check
      _
    $region3: #{tpu_custom_call.1} parent=1 // pred_check_branch
      %12 = sbr.rel (0) target = $region5
    $region4: #{tpu_custom_call.1} parent=1 // pred_region
      _
    $region5: #{tpu_custom_call.1} parent=1 // pred_fallthru
      _
    // Predicated region
    $region6: #{tpu_custom_call.1} parent=1 // pred_check
      _
    $region7: #{tpu_custom_call.1} parent=1 // pred_check_branch
      %14 = sbr.rel (0) target = $region9
    $region8: #{tpu_custom_call.1} parent=1 // pred_region
      _
    $region9: #{tpu_custom_call.1} parent=1 // pred_fallthru
      _
    // Predicated region
    $region10: #{tpu_custom_call.1} parent=1 // pred_check
      _
    $region11: #{tpu_custom_call.1} parent=1 // pred_check_branch
      %16 = sbr.rel (0) target = $region13
    $region12: #{tpu_custom_call.1} parent=1 // pred_region
      %18 = vsyncadd [#allocation3], 0
      %s20 = sshll.u32 %s2, 4
      %s21 = int_to_ptr.hbm [resolvable:$true] %s20
      %s22 = sshll.u32 [#allocation2], 4
      %s23 = int_to_ptr.vmem [resolvable:$true] %s22
      %25 = dma.hbm_to_vmem [thread:$0]  %s21, 32, %s23, [#allocation3]
    $region13: #{tpu_custom_call.1} parent=1 // pred_fallthru
      _
    // Predicated region
    $region14: #{tpu_custom_call.1} parent=1 // pred_check
      _
    $region15: #{tpu_custom_call.1} parent=1 // pred_check_branch
      %27 = sbr.rel (0) target = $region17
    $region16: #{tpu_custom_call.1} parent=1 // pred_region
      _
    $region17: #{tpu_custom_call.1} parent=1 // pred_fallthru
      _
    // Predicated region
    $region18: #{tpu_custom_call.1} parent=1 // pred_check
      _
    $region19: #{tpu_custom_call.1} parent=1 // pred_check_branch
      %29 = sbr.rel (0) target = $region21
    $region20: #{tpu_custom_call.1} parent=1 // pred_region
      %31 = dma.done [#allocation3], 32
    $region21: #{tpu_custom_call.1} parent=1 // pred_fallthru
      _
    %v33 = vld [vmem:[%s0] sm:$0xff]
    %v34 = vld [vmem:[%s0 + $0x8] sm:$0xff]
    %vm35 = vcmask 261120
    %v36 = vsel %vm35, %v33, 0.0
    %37 = vadd.xlane.f32.xlu0 %v36
    %v38 = vpop.xlane.xlu0 %37
    %v39 = vsel %vm35, %v34, 0.0
    %40 = vadd.xlane.f32.xlu0 %v39
    %v41 = vpop.xlane.xlu0 %40
    %v42 = vrcp.pop 32.0
    %v43 = vmul.f32 32.0, %v42
    %v44 = vsub.f32 1.0, %v43
    %v45 = vmul.f32 %v42, %v44
    %v46 = vadd.f32 %v42, %v45
    %vm47 = vweird.f32 %v42
    %v48 = vsel %vm47, %v42, %v46
    %v49 = vmul.f32 %v38, %v48
    %v50 = vmul.f32 %v41, %v48
    %v51 = vsub.f32 %v33, %v49
    %v52 = vsub.f32 %v34, %v50
    %v53 = vmul.f32 %v51, %v51
    %v54 = vmul.f32 %v52, %v52
    %v55 = vsel %vm35, %v53, 0.0
    %56 = vadd.xlane.f32.xlu0 %v55
    %v57 = vpop.xlane.xlu0 %56
    %v58 = vsel %vm35, %v54, 0.0
    %59 = vadd.xlane.f32.xlu0 %v58
    %v60 = vpop.xlane.xlu0 %59
    %v61 = vmul.f32 %v57, %v48
    %v62 = vmul.f32 %v60, %v48
    %v63 = vadd.f32 %v61, 1e-05
    %v64 = vadd.f32 %v62, 1e-05
    %v65 = vrsqrt.pop %v63
    %v66 = vmul.f32 %v65, %v63
    %v67 = vmul.f32 %v66, %v65
    %v68 = vmul.f32 0.5, %v67
    %v69 = vsub.f32 1.5, %v68
    %v70 = vmul.f32 %v65, %v69
    %vm71 = vweird.f32 %v63
    %vm72 = vweird.f32 %v65
    %vm73 = vmor %vm71, %vm72
    %v74 = vsel %vm73, %v65, %v70
    %v75 = vrsqrt.pop %v64
    %v76 = vmul.f32 %v75, %v64
    %v77 = vmul.f32 %v76, %v75
    %v78 = vmul.f32 0.5, %v77
    %v79 = vsub.f32 1.5, %v78
    %v80 = vmul.f32 %v75, %v79
    %vm81 = vweird.f32 %v64
    %vm82 = vweird.f32 %v75
    %vm83 = vmor %vm81, %vm82
    %v84 = vsel %vm83, %v75, %v80
    %v85 = vmul.f32 %v51, %v74
    %v86 = vmul.f32 %v52, %v84
    %v87 = vpack.c.bf16 %v86, %v85
    %v88 = vld [vmem:[%s1] sm:$0xff]
    %v89 = vld [vmem:[%s1 + $0x8] sm:$0xff]
    %v90 = vld [vmem:[%s1 + $0x10] sm:$0xff]
    %v91 = vld [vmem:[%s1 + $0x18] sm:$0xff]
    %v92 = vld [vmem:[#allocation2] sm:$0x3]
    %v94 = vperm.slane %v92, 0
    %v95 = vperm.slane %v92, 1
    %v102 = vunpack.c.l.b16 %v88
    %v103 = vunpack.c.h.b16 %v88
    %v104 = vunpack.c.l.b16 %v89
    %v105 = vunpack.c.h.b16 %v89
    %v106 = vunpack.c.l.b16 %v90
    %v107 = vunpack.c.h.b16 %v90
    %v108 = vunpack.c.l.b16 %v91
    %v109 = vunpack.c.h.b16 %v91
    %v110 = vpack.c.b16 %v104, %v102
    %v111 = vpack.c.b16 %v105, %v103
    %v112 = vpack.c.b16 %v108, %v106
    %v113 = vpack.c.b16 %v109, %v107
    %v119 = vsel %vm35, %v87, 0
    %121 = vmatpush.bf16.msra.mxu0 0
    %122 = vmatpush.bf16.msra.mxu0 0
    %123 = vmatpush.bf16.msra.mxu0 0
    %124 = vmatpush.bf16.msra.mxu0 0
    %125 = vmatpush.bf16.msra.mxu0 0
    %126 = vmatpush.bf16.msra.mxu0 0
    %127 = vmatpush.bf16.msra.mxu0 %v112
    %128 = vmatpush.bf16.msra.mxu0 %v110
    %129 = vmatmul.bf16.gmra.mxu0 %v119
    %v130 = vpop.f32.mrf.mxu0
    %v131 = vadd.f32 %v94, %v130
    %v132 = vpop.f32.mrf.mxu0
    %v133 = vadd.f32 %v94, %v132
    %134 = vdwg.mxu0
    %135 = vmatpush.bf16.msra.mxu0 0
    %136 = vmatpush.bf16.msra.mxu0 0
    %137 = vmatpush.bf16.msra.mxu0 0
    %138 = vmatpush.bf16.msra.mxu0 0
    %139 = vmatpush.bf16.msra.mxu0 0
    %140 = vmatpush.bf16.msra.mxu0 0
    %141 = vmatpush.bf16.msra.mxu0 %v113
    %142 = vmatpush.bf16.msra.mxu0 %v111
    %143 = vmatmul.bf16.gmra.mxu0 %v119
    %v144 = vpop.f32.mrf.mxu0
    %v145 = vadd.f32 %v95, %v144
    %v146 = vpop.f32.mrf.mxu0
    %v147 = vadd.f32 %v95, %v146
    %148 = vdwg.mxu0
    %v149 = vld [vmem:[%s3] sm:$0xf]
    %v150 = vld [vmem:[%s3 + $0x4] sm:$0xf]
    %v151 = vld [vmem:[%s3 + $0x8] sm:$0xf]
    %v152 = vld [vmem:[%s3 + $0xc] sm:$0xf]
    %v153 = vld [vmem:[%s3 + $0x10] sm:$0xf]
    %v154 = vld [vmem:[%s3 + $0x14] sm:$0xf]
    %v155 = vld [vmem:[%s3 + $0x18] sm:$0xf]
    %v156 = vld [vmem:[%s3 + $0x1c] sm:$0xf]
    %v157 = vunpack.c.l.bf16 %v149
    %v158 = vunpack.c.l.bf16 %v150
    %v159 = vunpack.c.l.bf16 %v151
    %v160 = vunpack.c.l.bf16 %v152
    %v161 = vunpack.c.l.bf16 %v153
    %v162 = vunpack.c.l.bf16 %v154
    %v163 = vunpack.c.l.bf16 %v155
    %v164 = vunpack.c.l.bf16 %v156
    %166 = vrot.lane.b32.xlu0 %v131, 112
    %v167 = vpop.permute.xlu0 %166
    %169 = vrot.lane.b32.xlu0 %v131, 96
    %v170 = vpop.permute.xlu0 %169
    %172 = vrot.lane.b32.xlu0 %v131, 80
    %v173 = vpop.permute.xlu0 %172
    %v175 = vrot.slane %v170, 4
    %vm176 = vcmask 1047556
    %v177 = vsel %vm176, %v175, %v131
    %v178 = vrot.slane %v131, 4
    %v179 = vsel %vm176, %v170, %v178
    %v181 = vunpack.c.l.s4 1983009808
    %v182 = vunpack.c.0.s8 %v181
    %v183 = vperm.slane %v177, %v182
    %v185 = vunpack.c.l.s4 1983009808
    %v186 = vunpack.c.0.s8 %v185
    %v187 = vperm.slane %v179, %v186
    %v188 = vrot.slane %v173, 4
    %v189 = vsel %vm176, %v188, %v167
    %v190 = vrot.slane %v167, 4
    %v191 = vsel %vm176, %v173, %v190
    %v193 = vunpack.c.l.s4 1983009808
    %v194 = vunpack.c.0.s8 %v193
    %v195 = vperm.slane %v189, %v194
    %v197 = vunpack.c.l.s4 1983009808
    %v198 = vunpack.c.0.s8 %v197
    %v199 = vperm.slane %v191, %v198
    %v200 = vrot.slane %v195, 4
    %v201 = vsel %vm176, %v200, %v183
    %v202 = vrot.slane %v183, 4
    %v203 = vsel %vm176, %v195, %v202
    %v205 = vunpack.c.l.s4 1934713408
    %v206 = vunpack.c.0.s8 %v205
    %v207 = vperm.slane %v201, %v206
    %v209 = vunpack.c.l.s4 1934713408
    %v210 = vunpack.c.0.s8 %v209
    %v211 = vperm.slane %v203, %v210
    %v212 = vrot.slane %v199, 4
    %v213 = vsel %vm176, %v212, %v187
    %v214 = vrot.slane %v187, 4
    %v215 = vsel %vm176, %v199, %v214
    %v217 = vunpack.c.l.s4 1934713408
    %v218 = vunpack.c.0.s8 %v217
    %v219 = vperm.slane %v213, %v218
    %v221 = vunpack.c.l.s4 1934713408
    %v222 = vunpack.c.0.s8 %v221
    %v223 = vperm.slane %v215, %v222
    %v224 = vrot.slane %v207, 4
    %v225 = vsel %vm176, 0.0, %v224
    %v226 = vrot.slane %v211, 4
    %v227 = vsel %vm176, 0.0, %v226
    %v228 = vrot.slane %v219, 4
    %v229 = vsel %vm176, 0.0, %v228
    %v230 = vrot.slane %v223, 4
    %v231 = vsel %vm176, 0.0, %v230
    %v232 = vsel %vm176, %v226, %v207
    %v234 = vunpack.c.l.s4 1983009808
    %v235 = vunpack.c.0.s8 %v234
    %v236 = vperm.slane %v232, %v235
    %v237 = vrot.slane %v227, 4
    %v238 = vsel %vm176, %v237, %v225
    %v240 = vunpack.c.l.s4 1983009808
    %v241 = vunpack.c.0.s8 %v240
    %v242 = vperm.slane %v238, %v241
    %v243 = vsel %vm176, %v230, %v219
    %v245 = vunpack.c.l.s4 1983009808
    %v246 = vunpack.c.0.s8 %v245
    %v247 = vperm.slane %v243, %v246
    %v248 = vrot.slane %v231, 4
    %v249 = vsel %vm176, %v248, %v229
    %v251 = vunpack.c.l.s4 1983009808
    %v252 = vunpack.c.0.s8 %v251
    %v253 = vperm.slane %v249, %v252
    %v254 = vrot.slane %v242, 4
    %v255 = vsel %vm176, %v254, %v236
    %v256 = vrot.slane %v236, 4
    %v257 = vsel %vm176, %v242, %v256
    %v259 = vunpack.c.l.s4 1934713408
    %v260 = vunpack.c.0.s8 %v259
    %v261 = vperm.slane %v255, %v260
    %v263 = vunpack.c.l.s4 1934713408
    %v264 = vunpack.c.0.s8 %v263
    %v265 = vperm.slane %v257, %v264
    %v266 = vrot.slane %v253, 4
    %v267 = vsel %vm176, %v266, %v247
    %v268 = vrot.slane %v247, 4
    %v269 = vsel %vm176, %v253, %v268
    %v271 = vunpack.c.l.s4 1934713408
    %v272 = vunpack.c.0.s8 %v271
    %v273 = vperm.slane %v267, %v272
    %v275 = vunpack.c.l.s4 1934713408
    %v276 = vunpack.c.0.s8 %v275
    %v277 = vperm.slane %v269, %v276
    %v278 = vrot.slane %v273, 4
    %v279 = vsel %vm176, %v278, %v261
    %v280 = vrot.slane %v261, 4
    %v281 = vsel %vm176, %v273, %v280
    %v282 = vrot.slane %v277, 4
    %v283 = vsel %vm176, %v282, %v265
    %v284 = vrot.slane %v265, 4
    %v285 = vsel %vm176, %v277, %v284
    %286 = vrot.lane.b32.xlu0 %v131, 64
    %v287 = vpop.permute.xlu0 %286
    %288 = vrot.lane.b32.xlu0 %v167, 64
    %v289 = vpop.permute.xlu0 %288
    %290 = vrot.lane.b32.xlu0 %v170, 64
    %v291 = vpop.permute.xlu0 %290
    %292 = vrot.lane.b32.xlu0 %v173, 64
    %v293 = vpop.permute.xlu0 %292
    %v298 = vrot.slane %v291, 4
    %v299 = vsel %vm176, %v298, %v287
    %v300 = vrot.slane %v287, 4
    %v301 = vsel %vm176, %v291, %v300
    %v303 = vunpack.c.l.s4 1983009808
    %v304 = vunpack.c.0.s8 %v303
    %v305 = vperm.slane %v299, %v304
    %v307 = vunpack.c.l.s4 1983009808
    %v308 = vunpack.c.0.s8 %v307
    %v309 = vperm.slane %v301, %v308
    %v310 = vrot.slane %v293, 4
    %v311 = vsel %vm176, %v310, %v289
    %v312 = vrot.slane %v289, 4
    %v313 = vsel %vm176, %v293, %v312
    %v315 = vunpack.c.l.s4 1983009808
    %v316 = vunpack.c.0.s8 %v315
    %v317 = vperm.slane %v311, %v316
    %v319 = vunpack.c.l.s4 1983009808
    %v320 = vunpack.c.0.s8 %v319
    %v321 = vperm.slane %v313, %v320
    %v322 = vrot.slane %v317, 4
    %v323 = vsel %vm176, %v322, %v305
    %v324 = vrot.slane %v305, 4
    %v325 = vsel %vm176, %v317, %v324
    %v327 = vunpack.c.l.s4 1934713408
    %v328 = vunpack.c.0.s8 %v327
    %v329 = vperm.slane %v323, %v328
    %v331 = vunpack.c.l.s4 1934713408
    %v332 = vunpack.c.0.s8 %v331
    %v333 = vperm.slane %v325, %v332
    %v334 = vrot.slane %v321, 4
    %v335 = vsel %vm176, %v334, %v309
    %v336 = vrot.slane %v309, 4
    %v337 = vsel %vm176, %v321, %v336
    %v339 = vunpack.c.l.s4 1934713408
    %v340 = vunpack.c.0.s8 %v339
    %v341 = vperm.slane %v335, %v340
    %v343 = vunpack.c.l.s4 1934713408
    %v344 = vunpack.c.0.s8 %v343
    %v345 = vperm.slane %v337, %v344
    %v346 = vrot.slane %v329, 4
    %v347 = vsel %vm176, 0.0, %v346
    %v348 = vrot.slane %v333, 4
    %v349 = vsel %vm176, 0.0, %v348
    %v350 = vrot.slane %v341, 4
    %v351 = vsel %vm176, 0.0, %v350
    %v352 = vrot.slane %v345, 4
    %v353 = vsel %vm176, 0.0, %v352
    %v354 = vsel %vm176, %v348, %v329
    %v356 = vunpack.c.l.s4 1983009808
    %v357 = vunpack.c.0.s8 %v356
    %v358 = vperm.slane %v354, %v357
    %v359 = vrot.slane %v349, 4
    %v360 = vsel %vm176, %v359, %v347
    %v362 = vunpack.c.l.s4 1983009808
    %v363 = vunpack.c.0.s8 %v362
    %v364 = vperm.slane %v360, %v363
    %v365 = vsel %vm176, %v352, %v341
    %v367 = vunpack.c.l.s4 1983009808
    %v368 = vunpack.c.0.s8 %v367
    %v369 = vperm.slane %v365, %v368
    %v370 = vrot.slane %v353, 4
    %v371 = vsel %vm176, %v370, %v351
    %v373 = vunpack.c.l.s4 1983009808
    %v374 = vunpack.c.0.s8 %v373
    %v375 = vperm.slane %v371, %v374
    %v376 = vrot.slane %v364, 4
    %v377 = vsel %vm176, %v376, %v358
    %v378 = vrot.slane %v358, 4
    %v379 = vsel %vm176, %v364, %v378
    %v381 = vunpack.c.l.s4 1934713408
    %v382 = vunpack.c.0.s8 %v381
    %v383 = vperm.slane %v377, %v382
    %v385 = vunpack.c.l.s4 1934713408
    %v386 = vunpack.c.0.s8 %v385
    %v387 = vperm.slane %v379, %v386
    %v388 = vrot.slane %v375, 4
    %v389 = vsel %vm176, %v388, %v369
    %v390 = vrot.slane %v369, 4
    %v391 = vsel %vm176, %v375, %v390
    %v393 = vunpack.c.l.s4 1934713408
    %v394 = vunpack.c.0.s8 %v393
    %v395 = vperm.slane %v389, %v394
    %v397 = vunpack.c.l.s4 1934713408
    %v398 = vunpack.c.0.s8 %v397
    %v399 = vperm.slane %v391, %v398
    %v400 = vrot.slane %v395, 4
    %v401 = vsel %vm176, %v400, %v383
    %v402 = vrot.slane %v383, 4
    %v403 = vsel %vm176, %v395, %v402
    %v404 = vrot.slane %v399, 4
    %v405 = vsel %vm176, %v404, %v387
    %v406 = vrot.slane %v387, 4
    %v407 = vsel %vm176, %v399, %v406
    %409 = vrot.lane.b32.xlu0 %v145, 112
    %v410 = vpop.permute.xlu0 %409
    %412 = vrot.lane.b32.xlu0 %v145, 96
    %v413 = vpop.permute.xlu0 %412
    %415 = vrot.lane.b32.xlu0 %v145, 80
    %v416 = vpop.permute.xlu0 %415
    %v418 = vrot.slane %v413, 4
    %v419 = vsel %vm176, %v418, %v145
    %v420 = vrot.slane %v145, 4
    %v421 = vsel %vm176, %v413, %v420
    %v423 = vunpack.c.l.s4 1983009808
    %v424 = vunpack.c.0.s8 %v423
    %v425 = vperm.slane %v419, %v424
    %v427 = vunpack.c.l.s4 1983009808
    %v428 = vunpack.c.0.s8 %v427
    %v429 = vperm.slane %v421, %v428
    %v430 = vrot.slane %v416, 4
    %v431 = vsel %vm176, %v430, %v410
    %v432 = vrot.slane %v410, 4
    %v433 = vsel %vm176, %v416, %v432
    %v435 = vunpack.c.l.s4 1983009808
    %v436 = vunpack.c.0.s8 %v435
    %v437 = vperm.slane %v431, %v436
    %v439 = vunpack.c.l.s4 1983009808
    %v440 = vunpack.c.0.s8 %v439
    %v441 = vperm.slane %v433, %v440
    %v442 = vrot.slane %v437, 4
    %v443 = vsel %vm176, %v442, %v425
    %v444 = vrot.slane %v425, 4
    %v445 = vsel %vm176, %v437, %v444
    %v447 = vunpack.c.l.s4 1934713408
    %v448 = vunpack.c.0.s8 %v447
    %v449 = vperm.slane %v443, %v448
    %v451 = vunpack.c.l.s4 1934713408
    %v452 = vunpack.c.0.s8 %v451
    %v453 = vperm.slane %v445, %v452
    %v454 = vrot.slane %v441, 4
    %v455 = vsel %vm176, %v454, %v429
    %v456 = vrot.slane %v429, 4
    %v457 = vsel %vm176, %v441, %v456
    %v459 = vunpack.c.l.s4 1934713408
    %v460 = vunpack.c.0.s8 %v459
    %v461 = vperm.slane %v455, %v460
    %v463 = vunpack.c.l.s4 1934713408
    %v464 = vunpack.c.0.s8 %v463
    %v465 = vperm.slane %v457, %v464
    %v466 = vrot.slane %v449, 4
    %v467 = vsel %vm176, 0.0, %v466
    %v468 = vrot.slane %v453, 4
    %v469 = vsel %vm176, 0.0, %v468
    %v470 = vrot.slane %v461, 4
    %v471 = vsel %vm176, 0.0, %v470
    %v472 = vrot.slane %v465, 4
    %v473 = vsel %vm176, 0.0, %v472
    %v474 = vsel %vm176, %v468, %v449
    %v476 = vunpack.c.l.s4 1983009808
    %v477 = vunpack.c.0.s8 %v476
    %v478 = vperm.slane %v474, %v477
    %v479 = vrot.slane %v469, 4
    %v480 = vsel %vm176, %v479, %v467
    %v482 = vunpack.c.l.s4 1983009808
    %v483 = vunpack.c.0.s8 %v482
    %v484 = vperm.slane %v480, %v483
    %v485 = vsel %vm176, %v472, %v461
    %v487 = vunpack.c.l.s4 1983009808
    %v488 = vunpack.c.0.s8 %v487
    %v489 = vperm.slane %v485, %v488
    %v490 = vrot.slane %v473, 4
    %v491 = vsel %vm176, %v490, %v471
    %v493 = vunpack.c.l.s4 1983009808
    %v494 = vunpack.c.0.s8 %v493
    %v495 = vperm.slane %v491, %v494
    %v496 = vrot.slane %v484, 4
    %v497 = vsel %vm176, %v496, %v478
    %v498 = vrot.slane %v478, 4
    %v499 = vsel %vm176, %v484, %v498
    %v501 = vunpack.c.l.s4 1934713408
    %v502 = vunpack.c.0.s8 %v501
    %v503 = vperm.slane %v497, %v502
    %v505 = vunpack.c.l.s4 1934713408
    %v506 = vunpack.c.0.s8 %v505
    %v507 = vperm.slane %v499, %v506
    %v508 = vrot.slane %v495, 4
    %v509 = vsel %vm176, %v508, %v489
    %v510 = vrot.slane %v489, 4
    %v511 = vsel %vm176, %v495, %v510
    %v513 = vunpack.c.l.s4 1934713408
    %v514 = vunpack.c.0.s8 %v513
    %v515 = vperm.slane %v509, %v514
    %v517 = vunpack.c.l.s4 1934713408
    %v518 = vunpack.c.0.s8 %v517
    %v519 = vperm.slane %v511, %v518
    %v520 = vrot.slane %v515, 4
    %v521 = vsel %vm176, %v520, %v503
    %v522 = vrot.slane %v503, 4
    %v523 = vsel %vm176, %v515, %v522
    %v524 = vrot.slane %v519, 4
    %v525 = vsel %vm176, %v524, %v507
    %v526 = vrot.slane %v507, 4
    %v527 = vsel %vm176, %v519, %v526
    %vm528 = vcmask 130048
    %v530 = vsel %vm528, %v279, 0
    %v533 = vsel %vm528, %v401, 0
    %535 = vmatpush.xpose.msra.mxu0 0.0
    %536 = vmatpush.xpose.msra.mxu0 0.0
    %537 = vmatpush.xpose.msra.mxu0 0.0
    %538 = vmatpush.xpose.msra.mxu0 0.0
    %539 = vmatpush.xpose.msra.mxu0 0.0
    %540 = vmatpush.xpose.msra.mxu0 0.0
    %541 = vmatpush.xpose.msra.mxu0 0.0
    %542 = vmatpush.xpose.msra.mxu0 0.0
    %543 = vmatpush.xpose.msra.mxu0 0.0
    %544 = vmatpush.xpose.msra.mxu0 0.0
    %545 = vmatpush.xpose.msra.mxu0 0.0
    %546 = vmatpush.xpose.msra.mxu0 0.0
    %547 = vmatpush.xpose.msra.mxu0 0.0
    %548 = vmatpush.xpose.msra.mxu0 0.0
    %549 = vmatpush.xpose.msra.mxu0 0.0
    %550 = vmatpush.xpose.msra.mxu0 %v533
    %551 = vmatmul.f32.gmra.mxu0 %v530
    %v552 = vpop.f32.mrf.mxu0
    %v553 = vadd.f32 0.0, %v552
    %554 = vdwg.mxu0
    %v556 = vsel %vm528, %v281, 0
    %v559 = vsel %vm528, %v403, 0
    %561 = vmatpush.xpose.msra.mxu0 0.0
    %562 = vmatpush.xpose.msra.mxu0 0.0
    %563 = vmatpush.xpose.msra.mxu0 0.0
    %564 = vmatpush.xpose.msra.mxu0 0.0
    %565 = vmatpush.xpose.msra.mxu0 0.0
    %566 = vmatpush.xpose.msra.mxu0 0.0
    %567 = vmatpush.xpose.msra.mxu0 0.0
    %568 = vmatpush.xpose.msra.mxu0 0.0
    %569 = vmatpush.xpose.msra.mxu0 0.0
    %570 = vmatpush.xpose.msra.mxu0 0.0
    %571 = vmatpush.xpose.msra.mxu0 0.0
    %572 = vmatpush.xpose.msra.mxu0 0.0
    %573 = vmatpush.xpose.msra.mxu0 0.0
    %574 = vmatpush.xpose.msra.mxu0 0.0
    %575 = vmatpush.xpose.msra.mxu0 0.0
    %576 = vmatpush.xpose.msra.mxu0 %v559
    %577 = vmatmul.f32.gmra.mxu0 %v556
    %v578 = vpop.f32.mrf.mxu0
    %v579 = vadd.f32 0.0, %v578
    %580 = vdwg.mxu0
    %v582 = vsel %vm528, %v283, 0
    %v585 = vsel %vm528, %v405, 0
    %587 = vmatpush.xpose.msra.mxu0 0.0
    %588 = vmatpush.xpose.msra.mxu0 0.0
    %589 = vmatpush.xpose.msra.mxu0 0.0
    %590 = vmatpush.xpose.msra.mxu0 0.0
    %591 = vmatpush.xpose.msra.mxu0 0.0
    %592 = vmatpush.xpose.msra.mxu0 0.0
    %593 = vmatpush.xpose.msra.mxu0 0.0
    %594 = vmatpush.xpose.msra.mxu0 0.0
    %595 = vmatpush.xpose.msra.mxu0 0.0
    %596 = vmatpush.xpose.msra.mxu0 0.0
    %597 = vmatpush.xpose.msra.mxu0 0.0
    %598 = vmatpush.xpose.msra.mxu0 0.0
    %599 = vmatpush.xpose.msra.mxu0 0.0
    %600 = vmatpush.xpose.msra.mxu0 0.0
    %601 = vmatpush.xpose.msra.mxu0 0.0
    %602 = vmatpush.xpose.msra.mxu0 %v585
    %603 = vmatmul.f32.gmra.mxu0 %v582
    %v604 = vpop.f32.mrf.mxu0
    %v605 = vadd.f32 0.0, %v604
    %606 = vdwg.mxu0
    %v608 = vsel %vm528, %v285, 0
    %v611 = vsel %vm528, %v407, 0
    %613 = vmatpush.xpose.msra.mxu0 0.0
    %614 = vmatpush.xpose.msra.mxu0 0.0
    %615 = vmatpush.xpose.msra.mxu0 0.0
    %616 = vmatpush.xpose.msra.mxu0 0.0
    %617 = vmatpush.xpose.msra.mxu0 0.0
    %618 = vmatpush.xpose.msra.mxu0 0.0
    %619 = vmatpush.xpose.msra.mxu0 0.0
    %620 = vmatpush.xpose.msra.mxu0 0.0
    %621 = vmatpush.xpose.msra.mxu0 0.0
    %622 = vmatpush.xpose.msra.mxu0 0.0
    %623 = vmatpush.xpose.msra.mxu0 0.0
    %624 = vmatpush.xpose.msra.mxu0 0.0
    %625 = vmatpush.xpose.msra.mxu0 0.0
    %626 = vmatpush.xpose.msra.mxu0 0.0
    %627 = vmatpush.xpose.msra.mxu0 0.0
    %628 = vmatpush.xpose.msra.mxu0 %v611
    %629 = vmatmul.f32.gmra.mxu0 %v608
    %v630 = vpop.f32.mrf.mxu0
    %v631 = vadd.f32 0.0, %v630
    %632 = vdwg.mxu0
    %vm633 = vcmask 64512
    %v634 = vsel %vm633, %v553, -inf
    %635 = vmax.xlane.f32.xlu0 %v634
    %v636 = vpop.xlane.xlu0 %635
    %v637 = vsel %vm633, %v579, -inf
    %638 = vmax.xlane.f32.xlu0 %v637
    %v639 = vpop.xlane.xlu0 %638
    %v640 = vsel %vm633, %v605, -inf
    %641 = vmax.xlane.f32.xlu0 %v640
    %v642 = vpop.xlane.xlu0 %641
    %v643 = vsel %vm633, %v631, -inf
    %644 = vmax.xlane.f32.xlu0 %v643
    %v645 = vpop.xlane.xlu0 %644
    %v646 = vsub.f32 %v553, %v636
    %v647 = vsub.f32 %v579, %v639
    %v648 = vsub.f32 %v605, %v642
    %v649 = vsub.f32 %v631, %v645
    %v650 = vmul.f32 %v646, 1.442695
    %v651 = vpow.pop %v650
    %v652 = vmul.f32 %v647, 1.442695
    %v653 = vpow.pop %v652
    %v654 = vmul.f32 %v648, 1.442695
    %v655 = vpow.pop %v654
    %v656 = vmul.f32 %v649, 1.442695
    %v657 = vpow.pop %v656
    %v658 = vsel %vm633, %v651, 0.0
    %659 = vadd.xlane.f32.xlu0 %v658
    %v660 = vpop.xlane.xlu0 %659
    %v661 = vsel %vm633, %v653, 0.0
    %662 = vadd.xlane.f32.xlu0 %v661
    %v663 = vpop.xlane.xlu0 %662
    %v664 = vsel %vm633, %v655, 0.0
    %665 = vadd.xlane.f32.xlu0 %v664
    %v666 = vpop.xlane.xlu0 %665
    %v667 = vsel %vm633, %v657, 0.0
    %668 = vadd.xlane.f32.xlu0 %v667
    %v669 = vpop.xlane.xlu0 %668
    %v670 = vrcp.pop %v660
    %v671 = vrcp.pop %v663
    %v672 = vrcp.pop %v666
    %v673 = vrcp.pop %v669
    %v674 = vmul.f32 %v651, %v670
    %v675 = vmul.f32 %v653, %v671
    %v676 = vmul.f32 %v655, %v672
    %v677 = vmul.f32 %v657, %v673
    %v679 = vsel %vm633, %v674, 0
    %681 = vmatpush.msra.mxu0 0.0
    %682 = vmatpush.msra.mxu0 0.0
    %683 = vmatpush.msra.mxu0 0.0
    %684 = vmatpush.msra.mxu0 0.0
    %685 = vmatpush.msra.mxu0 0.0
    %686 = vmatpush.msra.mxu0 0.0
    %687 = vmatpush.msra.mxu0 0.0
    %688 = vmatpush.msra.mxu0 0.0
    %689 = vmatpush.msra.mxu0 0.0
    %690 = vmatpush.msra.mxu0 0.0
    %691 = vmatpush.msra.mxu0 0.0
    %692 = vmatpush.msra.mxu0 0.0
    %693 = vmatpush.msra.mxu0 0.0
    %694 = vmatpush.msra.mxu0 0.0
    %695 = vmatpush.msra.mxu0 0.0
    %696 = vmatpush.msra.mxu0 %v521
    %697 = vmatmul.f32.gmra.mxu0 %v679
    %v698 = vpop.f32.mrf.mxu0
    %v699 = vadd.f32 0.0, %v698
    %700 = vdwg.mxu0
    %v702 = vsel %vm633, %v675, 0
    %704 = vmatpush.msra.mxu0 0.0
    %705 = vmatpush.msra.mxu0 0.0
    %706 = vmatpush.msra.mxu0 0.0
    %707 = vmatpush.msra.mxu0 0.0
    %708 = vmatpush.msra.mxu0 0.0
    %709 = vmatpush.msra.mxu0 0.0
    %710 = vmatpush.msra.mxu0 0.0
    %711 = vmatpush.msra.mxu0 0.0
    %712 = vmatpush.msra.mxu0 0.0
    %713 = vmatpush.msra.mxu0 0.0
    %714 = vmatpush.msra.mxu0 0.0
    %715 = vmatpush.msra.mxu0 0.0
    %716 = vmatpush.msra.mxu0 0.0
    %717 = vmatpush.msra.mxu0 0.0
    %718 = vmatpush.msra.mxu0 0.0
    %719 = vmatpush.msra.mxu0 %v523
    %720 = vmatmul.f32.gmra.mxu0 %v702
    %v721 = vpop.f32.mrf.mxu0
    %v722 = vadd.f32 0.0, %v721
    %723 = vdwg.mxu0
    %v725 = vsel %vm633, %v676, 0
    %727 = vmatpush.msra.mxu0 0.0
    %728 = vmatpush.msra.mxu0 0.0
    %729 = vmatpush.msra.mxu0 0.0
    %730 = vmatpush.msra.mxu0 0.0
    %731 = vmatpush.msra.mxu0 0.0
    %732 = vmatpush.msra.mxu0 0.0
    %733 = vmatpush.msra.mxu0 0.0
    %734 = vmatpush.msra.mxu0 0.0
    %735 = vmatpush.msra.mxu0 0.0
    %736 = vmatpush.msra.mxu0 0.0
    %737 = vmatpush.msra.mxu0 0.0
    %738 = vmatpush.msra.mxu0 0.0
    %739 = vmatpush.msra.mxu0 0.0
    %740 = vmatpush.msra.mxu0 0.0
    %741 = vmatpush.msra.mxu0 0.0
    %742 = vmatpush.msra.mxu0 %v525
    %743 = vmatmul.f32.gmra.mxu0 %v725
    %v744 = vpop.f32.mrf.mxu0
    %v745 = vadd.f32 0.0, %v744
    %746 = vdwg.mxu0
    %v748 = vsel %vm633, %v677, 0
    %750 = vmatpush.msra.mxu0 0.0
    %751 = vmatpush.msra.mxu0 0.0
    %752 = vmatpush.msra.mxu0 0.0
    %753 = vmatpush.msra.mxu0 0.0
    %754 = vmatpush.msra.mxu0 0.0
    %755 = vmatpush.msra.mxu0 0.0
    %756 = vmatpush.msra.mxu0 0.0
    %757 = vmatpush.msra.mxu0 0.0
    %758 = vmatpush.msra.mxu0 0.0
    %759 = vmatpush.msra.mxu0 0.0
    %760 = vmatpush.msra.mxu0 0.0
    %761 = vmatpush.msra.mxu0 0.0
    %762 = vmatpush.msra.mxu0 0.0
    %763 = vmatpush.msra.mxu0 0.0
    %764 = vmatpush.msra.mxu0 0.0
    %765 = vmatpush.msra.mxu0 %v527
    %766 = vmatmul.f32.gmra.mxu0 %v748
    %v767 = vpop.f32.mrf.mxu0
    %v768 = vadd.f32 0.0, %v767
    %769 = vdwg.mxu0
    %v770 = vrot.slane %v745, 4
    %v771 = vsel %vm176, %v770, %v699
    %v772 = vrot.slane %v699, 4
    %v773 = vsel %vm176, %v745, %v772
    %v775 = vunpack.c.l.s4 1983009808
    %v776 = vunpack.c.0.s8 %v775
    %v777 = vperm.slane %v771, %v776
    %v779 = vunpack.c.l.s4 1983009808
    %v780 = vunpack.c.0.s8 %v779
    %v781 = vperm.slane %v773, %v780
    %v782 = vrot.slane %v768, 4
    %v783 = vsel %vm176, %v782, %v722
    %v784 = vrot.slane %v722, 4
    %v785 = vsel %vm176, %v768, %v784
    %v787 = vunpack.c.l.s4 1983009808
    %v788 = vunpack.c.0.s8 %v787
    %v789 = vperm.slane %v783, %v788
    %v791 = vunpack.c.l.s4 1983009808
    %v792 = vunpack.c.0.s8 %v791
    %v793 = vperm.slane %v785, %v792
    %v794 = vrot.slane %v789, 4
    %v795 = vsel %vm176, %v794, %v777
    %v796 = vrot.slane %v777, 4
    %v797 = vsel %vm176, %v789, %v796
    %v799 = vunpack.c.l.s4 1934713408
    %v800 = vunpack.c.0.s8 %v799
    %v801 = vperm.slane %v795, %v800
    %v803 = vunpack.c.l.s4 1934713408
    %v804 = vunpack.c.0.s8 %v803
    %v805 = vperm.slane %v797, %v804
    %v806 = vrot.slane %v793, 4
    %v807 = vsel %vm176, %v806, %v781
    %v808 = vrot.slane %v781, 4
    %v809 = vsel %vm176, %v793, %v808
    %v811 = vunpack.c.l.s4 1934713408
    %v812 = vunpack.c.0.s8 %v811
    %v813 = vperm.slane %v807, %v812
    %v815 = vunpack.c.l.s4 1934713408
    %v816 = vunpack.c.0.s8 %v815
    %v817 = vperm.slane %v809, %v816
    %v818 = vrot.slane %v801, 4
    %v819 = vsel %vm176, 0.0, %v818
    %v820 = vrot.slane %v805, 4
    %v821 = vsel %vm176, 0.0, %v820
    %v822 = vrot.slane %v813, 4
    %v823 = vsel %vm176, 0.0, %v822
    %v824 = vrot.slane %v817, 4
    %v825 = vsel %vm176, 0.0, %v824
    %v826 = vsel %vm176, %v820, %v801
    %v828 = vunpack.c.l.s4 1983009808
    %v829 = vunpack.c.0.s8 %v828
    %v830 = vperm.slane %v826, %v829
    %v831 = vrot.slane %v821, 4
    %v832 = vsel %vm176, %v831, %v819
    %v834 = vunpack.c.l.s4 1983009808
    %v835 = vunpack.c.0.s8 %v834
    %v836 = vperm.slane %v832, %v835
    %v837 = vsel %vm176, %v824, %v813
    %v839 = vunpack.c.l.s4 1983009808
    %v840 = vunpack.c.0.s8 %v839
    %v841 = vperm.slane %v837, %v840
    %v842 = vrot.slane %v825, 4
    %v843 = vsel %vm176, %v842, %v823
    %v845 = vunpack.c.l.s4 1983009808
    %v846 = vunpack.c.0.s8 %v845
    %v847 = vperm.slane %v843, %v846
    %v848 = vrot.slane %v836, 4
    %v849 = vsel %vm176, %v848, %v830
    %v850 = vrot.slane %v830, 4
    %v851 = vsel %vm176, %v836, %v850
    %v853 = vunpack.c.l.s4 1934713408
    %v854 = vunpack.c.0.s8 %v853
    %v855 = vperm.slane %v849, %v854
    %v857 = vunpack.c.l.s4 1934713408
    %v858 = vunpack.c.0.s8 %v857
    %v859 = vperm.slane %v851, %v858
    %v860 = vrot.slane %v847, 4
    %v861 = vsel %vm176, %v860, %v841
    %v862 = vrot.slane %v841, 4
    %v863 = vsel %vm176, %v847, %v862
    %v865 = vunpack.c.l.s4 1934713408
    %v866 = vunpack.c.0.s8 %v865
    %v867 = vperm.slane %v861, %v866
    %v869 = vunpack.c.l.s4 1934713408
    %v870 = vunpack.c.0.s8 %v869
    %v871 = vperm.slane %v863, %v870
    %v872 = vrot.slane %v867, 4
    %v873 = vsel %vm176, %v872, %v855
    %v874 = vrot.slane %v855, 4
    %v875 = vsel %vm176, %v867, %v874
    %v876 = vrot.slane %v871, 4
    %v877 = vsel %vm176, %v876, %v859
    %v878 = vrot.slane %v859, 4
    %v879 = vsel %vm176, %v871, %v878
    %881 = vrot.lane.b32.xlu0 %v875, 16
    %v882 = vpop.permute.xlu0 %881
    %885 = vrot.lane.b32.xlu0 %v877, 32
    %v886 = vpop.permute.xlu0 %885
    %889 = vrot.lane.b32.xlu0 %v879, 48
    %v890 = vpop.permute.xlu0 %889
    %v892 = vsel %vm528, %v873, %v882
    %v893 = vsel %vm35, %v892, %v886
    %vm894 = vcmask 392192
    %v895 = vsel %vm894, %v893, %v890
    %vm896 = vcmask 523264
    %v898 = vsel %vm896, %v895, 0
    %900 = vmatpush.msra.mxu0 0.0
    %901 = vmatpush.msra.mxu0 0.0
    %902 = vmatpush.msra.mxu0 0.0
    %903 = vmatpush.msra.mxu0 0.0
    %904 = vmatpush.msra.mxu0 0.0
    %905 = vmatpush.msra.mxu0 0.0
    %906 = vmatpush.msra.mxu0 0.0
    %907 = vmatpush.msra.mxu0 0.0
    %908 = vmatpush.msra.mxu0 %v164
    %909 = vmatpush.msra.mxu0 %v163
    %910 = vmatpush.msra.mxu0 %v162
    %911 = vmatpush.msra.mxu0 %v161
    %912 = vmatpush.msra.mxu0 %v160
    %913 = vmatpush.msra.mxu0 %v159
    %914 = vmatpush.msra.mxu0 %v158
    %915 = vmatpush.msra.mxu0 %v157
    %916 = vmatmul.f32.gmra.mxu0 %v898
    %v917 = vpop.f32.mrf.mxu0
    %v918 = vadd.f32 0.0, %v917
    %919 = vdwg.mxu0
    %920 = vst.msk [vmem:[#allocation5] sm:$0xff] %vm35, %v918
    %922 = vrot.lane.b32.xlu0 %v133, 112
    %v923 = vpop.permute.xlu0 %922
    %925 = vrot.lane.b32.xlu0 %v133, 96
    %v926 = vpop.permute.xlu0 %925
    %928 = vrot.lane.b32.xlu0 %v133, 80
    %v929 = vpop.permute.xlu0 %928
    %v931 = vrot.slane %v926, 4
    %v932 = vsel %vm176, %v931, %v133
    %v933 = vrot.slane %v133, 4
    %v934 = vsel %vm176, %v926, %v933
    %v936 = vunpack.c.l.s4 1983009808
    %v937 = vunpack.c.0.s8 %v936
    %v938 = vperm.slane %v932, %v937
    %v940 = vunpack.c.l.s4 1983009808
    %v941 = vunpack.c.0.s8 %v940
    %v942 = vperm.slane %v934, %v941
    %v943 = vrot.slane %v929, 4
    %v944 = vsel %vm176, %v943, %v923
    %v945 = vrot.slane %v923, 4
    %v946 = vsel %vm176, %v929, %v945
    %v948 = vunpack.c.l.s4 1983009808
    %v949 = vunpack.c.0.s8 %v948
    %v950 = vperm.slane %v944, %v949
    %v952 = vunpack.c.l.s4 1983009808
    %v953 = vunpack.c.0.s8 %v952
    %v954 = vperm.slane %v946, %v953
    %v955 = vrot.slane %v950, 4
    %v956 = vsel %vm176, %v955, %v938
    %v957 = vrot.slane %v938, 4
    %v958 = vsel %vm176, %v950, %v957
    %v960 = vunpack.c.l.s4 1934713408
    %v961 = vunpack.c.0.s8 %v960
    %v962 = vperm.slane %v956, %v961
    %v964 = vunpack.c.l.s4 1934713408
    %v965 = vunpack.c.0.s8 %v964
    %v966 = vperm.slane %v958, %v965
    %v967 = vrot.slane %v954, 4
    %v968 = vsel %vm176, %v967, %v942
    %v969 = vrot.slane %v942, 4
    %v970 = vsel %vm176, %v954, %v969
    %v972 = vunpack.c.l.s4 1934713408
    %v973 = vunpack.c.0.s8 %v972
    %v974 = vperm.slane %v968, %v973
    %v976 = vunpack.c.l.s4 1934713408
    %v977 = vunpack.c.0.s8 %v976
    %v978 = vperm.slane %v970, %v977
    %v979 = vrot.slane %v962, 4
    %v980 = vsel %vm176, 0.0, %v979
    %v981 = vrot.slane %v966, 4
    %v982 = vsel %vm176, 0.0, %v981
    %v983 = vrot.slane %v974, 4
    %v984 = vsel %vm176, 0.0, %v983
    %v985 = vrot.slane %v978, 4
    %v986 = vsel %vm176, 0.0, %v985
    %v987 = vsel %vm176, %v981, %v962
    %v989 = vunpack.c.l.s4 1983009808
    %v990 = vunpack.c.0.s8 %v989
    %v991 = vperm.slane %v987, %v990
    %v992 = vrot.slane %v982, 4
    %v993 = vsel %vm176, %v992, %v980
    %v995 = vunpack.c.l.s4 1983009808
    %v996 = vunpack.c.0.s8 %v995
    %v997 = vperm.slane %v993, %v996
    %v998 = vsel %vm176, %v985, %v974
    %v1000 = vunpack.c.l.s4 1983009808
    %v1001 = vunpack.c.0.s8 %v1000
    %v1002 = vperm.slane %v998, %v1001
    %v1003 = vrot.slane %v986, 4
    %v1004 = vsel %vm176, %v1003, %v984
    %v1006 = vunpack.c.l.s4 1983009808
    %v1007 = vunpack.c.0.s8 %v1006
    %v1008 = vperm.slane %v1004, %v1007
    %v1009 = vrot.slane %v997, 4
    %v1010 = vsel %vm176, %v1009, %v991
    %v1011 = vrot.slane %v991, 4
    %v1012 = vsel %vm176, %v997, %v1011
    %v1014 = vunpack.c.l.s4 1934713408
    %v1015 = vunpack.c.0.s8 %v1014
    %v1016 = vperm.slane %v1010, %v1015
    %v1018 = vunpack.c.l.s4 1934713408
    %v1019 = vunpack.c.0.s8 %v1018
    %v1020 = vperm.slane %v1012, %v1019
    %v1021 = vrot.slane %v1008, 4
    %v1022 = vsel %vm176, %v1021, %v1002
    %v1023 = vrot.slane %v1002, 4
    %v1024 = vsel %vm176, %v1008, %v1023
    %v1026 = vunpack.c.l.s4 1934713408
    %v1027 = vunpack.c.0.s8 %v1026
    %v1028 = vperm.slane %v1022, %v1027
    %v1030 = vunpack.c.l.s4 1934713408
    %v1031 = vunpack.c.0.s8 %v1030
    %v1032 = vperm.slane %v1024, %v1031
    %v1033 = vrot.slane %v1028, 4
    %v1034 = vsel %vm176, %v1033, %v1016
    %v1035 = vrot.slane %v1016, 4
    %v1036 = vsel %vm176, %v1028, %v1035
    %v1037 = vrot.slane %v1032, 4
    %v1038 = vsel %vm176, %v1037, %v1020
    %v1039 = vrot.slane %v1020, 4
    %v1040 = vsel %vm176, %v1032, %v1039
    %1041 = vrot.lane.b32.xlu0 %v133, 64
    %v1042 = vpop.permute.xlu0 %1041
    %1043 = vrot.lane.b32.xlu0 %v923, 64
    %v1044 = vpop.permute.xlu0 %1043
    %1045 = vrot.lane.b32.xlu0 %v926, 64
    %v1046 = vpop.permute.xlu0 %1045
    %1047 = vrot.lane.b32.xlu0 %v929, 64
    %v1048 = vpop.permute.xlu0 %1047
    %v1053 = vrot.slane %v1046, 4
    %v1054 = vsel %vm176, %v1053, %v1042
    %v1055 = vrot.slane %v1042, 4
    %v1056 = vsel %vm176, %v1046, %v1055
    %v1058 = vunpack.c.l.s4 1983009808
    %v1059 = vunpack.c.0.s8 %v1058
    %v1060 = vperm.slane %v1054, %v1059
    %v1062 = vunpack.c.l.s4 1983009808
    %v1063 = vunpack.c.0.s8 %v1062
    %v1064 = vperm.slane %v1056, %v1063
    %v1065 = vrot.slane %v1048, 4
    %v1066 = vsel %vm176, %v1065, %v1044
    %v1067 = vrot.slane %v1044, 4
    %v1068 = vsel %vm176, %v1048, %v1067
    %v1070 = vunpack.c.l.s4 1983009808
    %v1071 = vunpack.c.0.s8 %v1070
    %v1072 = vperm.slane %v1066, %v1071
    %v1074 = vunpack.c.l.s4 1983009808
    %v1075 = vunpack.c.0.s8 %v1074
    %v1076 = vperm.slane %v1068, %v1075
    %v1077 = vrot.slane %v1072, 4
    %v1078 = vsel %vm176, %v1077, %v1060
    %v1079 = vrot.slane %v1060, 4
    %v1080 = vsel %vm176, %v1072, %v1079
    %v1082 = vunpack.c.l.s4 1934713408
    %v1083 = vunpack.c.0.s8 %v1082
    %v1084 = vperm.slane %v1078, %v1083
    %v1086 = vunpack.c.l.s4 1934713408
    %v1087 = vunpack.c.0.s8 %v1086
    %v1088 = vperm.slane %v1080, %v1087
    %v1089 = vrot.slane %v1076, 4
    %v1090 = vsel %vm176, %v1089, %v1064
    %v1091 = vrot.slane %v1064, 4
    %v1092 = vsel %vm176, %v1076, %v1091
    %v1094 = vunpack.c.l.s4 1934713408
    %v1095 = vunpack.c.0.s8 %v1094
    %v1096 = vperm.slane %v1090, %v1095
    %v1098 = vunpack.c.l.s4 1934713408
    %v1099 = vunpack.c.0.s8 %v1098
    %v1100 = vperm.slane %v1092, %v1099
    %v1101 = vrot.slane %v1084, 4
    %v1102 = vsel %vm176, 0.0, %v1101
    %v1103 = vrot.slane %v1088, 4
    %v1104 = vsel %vm176, 0.0, %v1103
    %v1105 = vrot.slane %v1096, 4
    %v1106 = vsel %vm176, 0.0, %v1105
    %v1107 = vrot.slane %v1100, 4
    %v1108 = vsel %vm176, 0.0, %v1107
    %v1109 = vsel %vm176, %v1103, %v1084
    %v1111 = vunpack.c.l.s4 1983009808
    %v1112 = vunpack.c.0.s8 %v1111
    %v1113 = vperm.slane %v1109, %v1112
    %v1114 = vrot.slane %v1104, 4
    %v1115 = vsel %vm176, %v1114, %v1102
    %v1117 = vunpack.c.l.s4 1983009808
    %v1118 = vunpack.c.0.s8 %v1117
    %v1119 = vperm.slane %v1115, %v1118
    %v1120 = vsel %vm176, %v1107, %v1096
    %v1122 = vunpack.c.l.s4 1983009808
    %v1123 = vunpack.c.0.s8 %v1122
    %v1124 = vperm.slane %v1120, %v1123
    %v1125 = vrot.slane %v1108, 4
    %v1126 = vsel %vm176, %v1125, %v1106
    %v1128 = vunpack.c.l.s4 1983009808
    %v1129 = vunpack.c.0.s8 %v1128
    %v1130 = vperm.slane %v1126, %v1129
    %v1131 = vrot.slane %v1119, 4
    %v1132 = vsel %vm176, %v1131, %v1113
    %v1133 = vrot.slane %v1113, 4
    %v1134 = vsel %vm176, %v1119, %v1133
    %v1136 = vunpack.c.l.s4 1934713408
    %v1137 = vunpack.c.0.s8 %v1136
    %v1138 = vperm.slane %v1132, %v1137
    %v1140 = vunpack.c.l.s4 1934713408
    %v1141 = vunpack.c.0.s8 %v1140
    %v1142 = vperm.slane %v1134, %v1141
    %v1143 = vrot.slane %v1130, 4
    %v1144 = vsel %vm176, %v1143, %v1124
    %v1145 = vrot.slane %v1124, 4
    %v1146 = vsel %vm176, %v1130, %v1145
    %v1148 = vunpack.c.l.s4 1934713408
    %v1149 = vunpack.c.0.s8 %v1148
    %v1150 = vperm.slane %v1144, %v1149
    %v1152 = vunpack.c.l.s4 1934713408
    %v1153 = vunpack.c.0.s8 %v1152
    %v1154 = vperm.slane %v1146, %v1153
    %v1155 = vrot.slane %v1150, 4
    %v1156 = vsel %vm176, %v1155, %v1138
    %v1157 = vrot.slane %v1138, 4
    %v1158 = vsel %vm176, %v1150, %v1157
    %v1159 = vrot.slane %v1154, 4
    %v1160 = vsel %vm176, %v1159, %v1142
    %v1161 = vrot.slane %v1142, 4
    %v1162 = vsel %vm176, %v1154, %v1161
    %1164 = vrot.lane.b32.xlu0 %v147, 112
    %v1165 = vpop.permute.xlu0 %1164
    %1167 = vrot.lane.b32.xlu0 %v147, 96
    %v1168 = vpop.permute.xlu0 %1167
    %1170 = vrot.lane.b32.xlu0 %v147, 80
    %v1171 = vpop.permute.xlu0 %1170
    %v1173 = vrot.slane %v1168, 4
    %v1174 = vsel %vm176, %v1173, %v147
    %v1175 = vrot.slane %v147, 4
    %v1176 = vsel %vm176, %v1168, %v1175
    %v1178 = vunpack.c.l.s4 1983009808
    %v1179 = vunpack.c.0.s8 %v1178
    %v1180 = vperm.slane %v1174, %v1179
    %v1182 = vunpack.c.l.s4 1983009808
    %v1183 = vunpack.c.0.s8 %v1182
    %v1184 = vperm.slane %v1176, %v1183
    %v1185 = vrot.slane %v1171, 4
    %v1186 = vsel %vm176, %v1185, %v1165
    %v1187 = vrot.slane %v1165, 4
    %v1188 = vsel %vm176, %v1171, %v1187
    %v1190 = vunpack.c.l.s4 1983009808
    %v1191 = vunpack.c.0.s8 %v1190
    %v1192 = vperm.slane %v1186, %v1191
    %v1194 = vunpack.c.l.s4 1983009808
    %v1195 = vunpack.c.0.s8 %v1194
    %v1196 = vperm.slane %v1188, %v1195
    %v1197 = vrot.slane %v1192, 4
    %v1198 = vsel %vm176, %v1197, %v1180
    %v1199 = vrot.slane %v1180, 4
    %v1200 = vsel %vm176, %v1192, %v1199
    %v1202 = vunpack.c.l.s4 1934713408
    %v1203 = vunpack.c.0.s8 %v1202
    %v1204 = vperm.slane %v1198, %v1203
    %v1206 = vunpack.c.l.s4 1934713408
    %v1207 = vunpack.c.0.s8 %v1206
    %v1208 = vperm.slane %v1200, %v1207
    %v1209 = vrot.slane %v1196, 4
    %v1210 = vsel %vm176, %v1209, %v1184
    %v1211 = vrot.slane %v1184, 4
    %v1212 = vsel %vm176, %v1196, %v1211
    %v1214 = vunpack.c.l.s4 1934713408
    %v1215 = vunpack.c.0.s8 %v1214
    %v1216 = vperm.slane %v1210, %v1215
    %v1218 = vunpack.c.l.s4 1934713408
    %v1219 = vunpack.c.0.s8 %v1218
    %v1220 = vperm.slane %v1212, %v1219
    %v1221 = vrot.slane %v1204, 4
    %v1222 = vsel %vm176, 0.0, %v1221
    %v1223 = vrot.slane %v1208, 4
    %v1224 = vsel %vm176, 0.0, %v1223
    %v1225 = vrot.slane %v1216, 4
    %v1226 = vsel %vm176, 0.0, %v1225
    %v1227 = vrot.slane %v1220, 4
    %v1228 = vsel %vm176, 0.0, %v1227
    %v1229 = vsel %vm176, %v1223, %v1204
    %v1231 = vunpack.c.l.s4 1983009808
    %v1232 = vunpack.c.0.s8 %v1231
    %v1233 = vperm.slane %v1229, %v1232
    %v1234 = vrot.slane %v1224, 4
    %v1235 = vsel %vm176, %v1234, %v1222
    %v1237 = vunpack.c.l.s4 1983009808
    %v1238 = vunpack.c.0.s8 %v1237
    %v1239 = vperm.slane %v1235, %v1238
    %v1240 = vsel %vm176, %v1227, %v1216
    %v1242 = vunpack.c.l.s4 1983009808
    %v1243 = vunpack.c.0.s8 %v1242
    %v1244 = vperm.slane %v1240, %v1243
    %v1245 = vrot.slane %v1228, 4
    %v1246 = vsel %vm176, %v1245, %v1226
    %v1248 = vunpack.c.l.s4 1983009808
    %v1249 = vunpack.c.0.s8 %v1248
    %v1250 = vperm.slane %v1246, %v1249
    %v1251 = vrot.slane %v1239, 4
    %v1252 = vsel %vm176, %v1251, %v1233
    %v1253 = vrot.slane %v1233, 4
    %v1254 = vsel %vm176, %v1239, %v1253
    %v1256 = vunpack.c.l.s4 1934713408
    %v1257 = vunpack.c.0.s8 %v1256
    %v1258 = vperm.slane %v1252, %v1257
    %v1260 = vunpack.c.l.s4 1934713408
    %v1261 = vunpack.c.0.s8 %v1260
    %v1262 = vperm.slane %v1254, %v1261
    %v1263 = vrot.slane %v1250, 4
    %v1264 = vsel %vm176, %v1263, %v1244
    %v1265 = vrot.slane %v1244, 4
    %v1266 = vsel %vm176, %v1250, %v1265
    %v1268 = vunpack.c.l.s4 1934713408
    %v1269 = vunpack.c.0.s8 %v1268
    %v1270 = vperm.slane %v1264, %v1269
    %v1272 = vunpack.c.l.s4 1934713408
    %v1273 = vunpack.c.0.s8 %v1272
    %v1274 = vperm.slane %v1266, %v1273
    %v1275 = vrot.slane %v1270, 4
    %v1276 = vsel %vm176, %v1275, %v1258
    %v1277 = vrot.slane %v1258, 4
    %v1278 = vsel %vm176, %v1270, %v1277
    %v1279 = vrot.slane %v1274, 4
    %v1280 = vsel %vm176, %v1279, %v1262
    %v1281 = vrot.slane %v1262, 4
    %v1282 = vsel %vm176, %v1274, %v1281
    %v1284 = vsel %vm528, %v1034, 0
    %v1287 = vsel %vm528, %v1156, 0
    %1289 = vmatpush.xpose.msra.mxu0 0.0
    %1290 = vmatpush.xpose.msra.mxu0 0.0
    %1291 = vmatpush.xpose.msra.mxu0 0.0
    %1292 = vmatpush.xpose.msra.mxu0 0.0
    %1293 = vmatpush.xpose.msra.mxu0 0.0
    %1294 = vmatpush.xpose.msra.mxu0 0.0
    %1295 = vmatpush.xpose.msra.mxu0 0.0
    %1296 = vmatpush.xpose.msra.mxu0 0.0
    %1297 = vmatpush.xpose.msra.mxu0 0.0
    %1298 = vmatpush.xpose.msra.mxu0 0.0
    %1299 = vmatpush.xpose.msra.mxu0 0.0
    %1300 = vmatpush.xpose.msra.mxu0 0.0
    %1301 = vmatpush.xpose.msra.mxu0 0.0
    %1302 = vmatpush.xpose.msra.mxu0 0.0
    %1303 = vmatpush.xpose.msra.mxu0 0.0
    %1304 = vmatpush.xpose.msra.mxu0 %v1287
    %1305 = vmatmul.f32.gmra.mxu0 %v1284
    %v1306 = vpop.f32.mrf.mxu0
    %v1307 = vadd.f32 0.0, %v1306
    %1308 = vdwg.mxu0
    %v1310 = vsel %vm528, %v1036, 0
    %v1313 = vsel %vm528, %v1158, 0
    %1315 = vmatpush.xpose.msra.mxu0 0.0
    %1316 = vmatpush.xpose.msra.mxu0 0.0
    %1317 = vmatpush.xpose.msra.mxu0 0.0
    %1318 = vmatpush.xpose.msra.mxu0 0.0
    %1319 = vmatpush.xpose.msra.mxu0 0.0
    %1320 = vmatpush.xpose.msra.mxu0 0.0
    %1321 = vmatpush.xpose.msra.mxu0 0.0
    %1322 = vmatpush.xpose.msra.mxu0 0.0
    %1323 = vmatpush.xpose.msra.mxu0 0.0
    %1324 = vmatpush.xpose.msra.mxu0 0.0
    %1325 = vmatpush.xpose.msra.mxu0 0.0
    %1326 = vmatpush.xpose.msra.mxu0 0.0
    %1327 = vmatpush.xpose.msra.mxu0 0.0
    %1328 = vmatpush.xpose.msra.mxu0 0.0
    %1329 = vmatpush.xpose.msra.mxu0 0.0
    %1330 = vmatpush.xpose.msra.mxu0 %v1313
    %1331 = vmatmul.f32.gmra.mxu0 %v1310
    %v1332 = vpop.f32.mrf.mxu0
    %v1333 = vadd.f32 0.0, %v1332
    %1334 = vdwg.mxu0
    %v1336 = vsel %vm528, %v1038, 0
    %v1339 = vsel %vm528, %v1160, 0
    %1341 = vmatpush.xpose.msra.mxu0 0.0
    %1342 = vmatpush.xpose.msra.mxu0 0.0
    %1343 = vmatpush.xpose.msra.mxu0 0.0
    %1344 = vmatpush.xpose.msra.mxu0 0.0
    %1345 = vmatpush.xpose.msra.mxu0 0.0
    %1346 = vmatpush.xpose.msra.mxu0 0.0
    %1347 = vmatpush.xpose.msra.mxu0 0.0
    %1348 = vmatpush.xpose.msra.mxu0 0.0
    %1349 = vmatpush.xpose.msra.mxu0 0.0
    %1350 = vmatpush.xpose.msra.mxu0 0.0
    %1351 = vmatpush.xpose.msra.mxu0 0.0
    %1352 = vmatpush.xpose.msra.mxu0 0.0
    %1353 = vmatpush.xpose.msra.mxu0 0.0
    %1354 = vmatpush.xpose.msra.mxu0 0.0
    %1355 = vmatpush.xpose.msra.mxu0 0.0
    %1356 = vmatpush.xpose.msra.mxu0 %v1339
    %1357 = vmatmul.f32.gmra.mxu0 %v1336
    %v1358 = vpop.f32.mrf.mxu0
    %v1359 = vadd.f32 0.0, %v1358
    %1360 = vdwg.mxu0
    %v1362 = vsel %vm528, %v1040, 0
    %v1365 = vsel %vm528, %v1162, 0
    %1367 = vmatpush.xpose.msra.mxu0 0.0
    %1368 = vmatpush.xpose.msra.mxu0 0.0
    %1369 = vmatpush.xpose.msra.mxu0 0.0
    %1370 = vmatpush.xpose.msra.mxu0 0.0
    %1371 = vmatpush.xpose.msra.mxu0 0.0
    %1372 = vmatpush.xpose.msra.mxu0 0.0
    %1373 = vmatpush.xpose.msra.mxu0 0.0
    %1374 = vmatpush.xpose.msra.mxu0 0.0
    %1375 = vmatpush.xpose.msra.mxu0 0.0
    %1376 = vmatpush.xpose.msra.mxu0 0.0
    %1377 = vmatpush.xpose.msra.mxu0 0.0
    %1378 = vmatpush.xpose.msra.mxu0 0.0
    %1379 = vmatpush.xpose.msra.mxu0 0.0
    %1380 = vmatpush.xpose.msra.mxu0 0.0
    %1381 = vmatpush.xpose.msra.mxu0 0.0
    %1382 = vmatpush.xpose.msra.mxu0 %v1365
    %1383 = vmatmul.f32.gmra.mxu0 %v1362
    %v1384 = vpop.f32.mrf.mxu0
    %v1385 = vadd.f32 0.0, %v1384
    %1386 = vdwg.mxu0
    %v1387 = vsel %vm633, %v1307, -inf
    %1388 = vmax.xlane.f32.xlu0 %v1387
    %v1389 = vpop.xlane.xlu0 %1388
    %v1390 = vsel %vm633, %v1333, -inf
    %1391 = vmax.xlane.f32.xlu0 %v1390
    %v1392 = vpop.xlane.xlu0 %1391
    %v1393 = vsel %vm633, %v1359, -inf
    %1394 = vmax.xlane.f32.xlu0 %v1393
    %v1395 = vpop.xlane.xlu0 %1394
    %v1396 = vsel %vm633, %v1385, -inf
    %1397 = vmax.xlane.f32.xlu0 %v1396
    %v1398 = vpop.xlane.xlu0 %1397
    %v1399 = vsub.f32 %v1307, %v1389
    %v1400 = vsub.f32 %v1333, %v1392
    %v1401 = vsub.f32 %v1359, %v1395
    %v1402 = vsub.f32 %v1385, %v1398
    %v1403 = vmul.f32 %v1399, 1.442695
    %v1404 = vpow.pop %v1403
    %v1405 = vmul.f32 %v1400, 1.442695
    %v1406 = vpow.pop %v1405
    %v1407 = vmul.f32 %v1401, 1.442695
    %v1408 = vpow.pop %v1407
    %v1409 = vmul.f32 %v1402, 1.442695
    %v1410 = vpow.pop %v1409
    %v1411 = vsel %vm633, %v1404, 0.0
    %1412 = vadd.xlane.f32.xlu0 %v1411
    %v1413 = vpop.xlane.xlu0 %1412
    %v1414 = vsel %vm633, %v1406, 0.0
    %1415 = vadd.xlane.f32.xlu0 %v1414
    %v1416 = vpop.xlane.xlu0 %1415
    %v1417 = vsel %vm633, %v1408, 0.0
    %1418 = vadd.xlane.f32.xlu0 %v1417
    %v1419 = vpop.xlane.xlu0 %1418
    %v1420 = vsel %vm633, %v1410, 0.0
    %1421 = vadd.xlane.f32.xlu0 %v1420
    %v1422 = vpop.xlane.xlu0 %1421
    %v1423 = vrcp.pop %v1413
    %v1424 = vrcp.pop %v1416
    %v1425 = vrcp.pop %v1419
    %v1426 = vrcp.pop %v1422
    %v1427 = vmul.f32 %v1404, %v1423
    %v1428 = vmul.f32 %v1406, %v1424
    %v1429 = vmul.f32 %v1408, %v1425
    %v1430 = vmul.f32 %v1410, %v1426
    %v1432 = vsel %vm633, %v1427, 0
    %1434 = vmatpush.msra.mxu0 0.0
    %1435 = vmatpush.msra.mxu0 0.0
    %1436 = vmatpush.msra.mxu0 0.0
    %1437 = vmatpush.msra.mxu0 0.0
    %1438 = vmatpush.msra.mxu0 0.0
    %1439 = vmatpush.msra.mxu0 0.0
    %1440 = vmatpush.msra.mxu0 0.0
    %1441 = vmatpush.msra.mxu0 0.0
    %1442 = vmatpush.msra.mxu0 0.0
    %1443 = vmatpush.msra.mxu0 0.0
    %1444 = vmatpush.msra.mxu0 0.0
    %1445 = vmatpush.msra.mxu0 0.0
    %1446 = vmatpush.msra.mxu0 0.0
    %1447 = vmatpush.msra.mxu0 0.0
    %1448 = vmatpush.msra.mxu0 0.0
    %1449 = vmatpush.msra.mxu0 %v1276
    %1450 = vmatmul.f32.gmra.mxu0 %v1432
    %v1451 = vpop.f32.mrf.mxu0
    %v1452 = vadd.f32 0.0, %v1451
    %1453 = vdwg.mxu0
    %v1455 = vsel %vm633, %v1428, 0
    %1457 = vmatpush.msra.mxu0 0.0
    %1458 = vmatpush.msra.mxu0 0.0
    %1459 = vmatpush.msra.mxu0 0.0
    %1460 = vmatpush.msra.mxu0 0.0
    %1461 = vmatpush.msra.mxu0 0.0
    %1462 = vmatpush.msra.mxu0 0.0
    %1463 = vmatpush.msra.mxu0 0.0
    %1464 = vmatpush.msra.mxu0 0.0
    %1465 = vmatpush.msra.mxu0 0.0
    %1466 = vmatpush.msra.mxu0 0.0
    %1467 = vmatpush.msra.mxu0 0.0
    %1468 = vmatpush.msra.mxu0 0.0
    %1469 = vmatpush.msra.mxu0 0.0
    %1470 = vmatpush.msra.mxu0 0.0
    %1471 = vmatpush.msra.mxu0 0.0
    %1472 = vmatpush.msra.mxu0 %v1278
    %1473 = vmatmul.f32.gmra.mxu0 %v1455
    %v1474 = vpop.f32.mrf.mxu0
    %v1475 = vadd.f32 0.0, %v1474
    %1476 = vdwg.mxu0
    %v1478 = vsel %vm633, %v1429, 0
    %1480 = vmatpush.msra.mxu0 0.0
    %1481 = vmatpush.msra.mxu0 0.0
    %1482 = vmatpush.msra.mxu0 0.0
    %1483 = vmatpush.msra.mxu0 0.0
    %1484 = vmatpush.msra.mxu0 0.0
    %1485 = vmatpush.msra.mxu0 0.0
    %1486 = vmatpush.msra.mxu0 0.0
    %1487 = vmatpush.msra.mxu0 0.0
    %1488 = vmatpush.msra.mxu0 0.0
    %1489 = vmatpush.msra.mxu0 0.0
    %1490 = vmatpush.msra.mxu0 0.0
    %1491 = vmatpush.msra.mxu0 0.0
    %1492 = vmatpush.msra.mxu0 0.0
    %1493 = vmatpush.msra.mxu0 0.0
    %1494 = vmatpush.msra.mxu0 0.0
    %1495 = vmatpush.msra.mxu0 %v1280
    %1496 = vmatmul.f32.gmra.mxu0 %v1478
    %v1497 = vpop.f32.mrf.mxu0
    %v1498 = vadd.f32 0.0, %v1497
    %1499 = vdwg.mxu0
    %v1501 = vsel %vm633, %v1430, 0
    %1503 = vmatpush.msra.mxu0 0.0
    %1504 = vmatpush.msra.mxu0 0.0
    %1505 = vmatpush.msra.mxu0 0.0
    %1506 = vmatpush.msra.mxu0 0.0
    %1507 = vmatpush.msra.mxu0 0.0
    %1508 = vmatpush.msra.mxu0 0.0
    %1509 = vmatpush.msra.mxu0 0.0
    %1510 = vmatpush.msra.mxu0 0.0
    %1511 = vmatpush.msra.mxu0 0.0
    %1512 = vmatpush.msra.mxu0 0.0
    %1513 = vmatpush.msra.mxu0 0.0
    %1514 = vmatpush.msra.mxu0 0.0
    %1515 = vmatpush.msra.mxu0 0.0
    %1516 = vmatpush.msra.mxu0 0.0
    %1517 = vmatpush.msra.mxu0 0.0
    %1518 = vmatpush.msra.mxu0 %v1282
    %1519 = vmatmul.f32.gmra.mxu0 %v1501
    %v1520 = vpop.f32.mrf.mxu0
    %v1521 = vadd.f32 0.0, %v1520
    %1522 = vdwg.mxu0
    %v1523 = vrot.slane %v1498, 4
    %v1524 = vsel %vm176, %v1523, %v1452
    %v1525 = vrot.slane %v1452, 4
    %v1526 = vsel %vm176, %v1498, %v1525
    %v1528 = vunpack.c.l.s4 1983009808
    %v1529 = vunpack.c.0.s8 %v1528
    %v1530 = vperm.slane %v1524, %v1529
    %v1532 = vunpack.c.l.s4 1983009808
    %v1533 = vunpack.c.0.s8 %v1532
    %v1534 = vperm.slane %v1526, %v1533
    %v1535 = vrot.slane %v1521, 4
    %v1536 = vsel %vm176, %v1535, %v1475
    %v1537 = vrot.slane %v1475, 4
    %v1538 = vsel %vm176, %v1521, %v1537
    %v1540 = vunpack.c.l.s4 1983009808
    %v1541 = vunpack.c.0.s8 %v1540
    %v1542 = vperm.slane %v1536, %v1541
    %v1544 = vunpack.c.l.s4 1983009808
    %v1545 = vunpack.c.0.s8 %v1544
    %v1546 = vperm.slane %v1538, %v1545
    %v1547 = vrot.slane %v1542, 4
    %v1548 = vsel %vm176, %v1547, %v1530
    %v1549 = vrot.slane %v1530, 4
    %v1550 = vsel %vm176, %v1542, %v1549
    %v1552 = vunpack.c.l.s4 1934713408
    %v1553 = vunpack.c.0.s8 %v1552
    %v1554 = vperm.slane %v1548, %v1553
    %v1556 = vunpack.c.l.s4 1934713408
    %v1557 = vunpack.c.0.s8 %v1556
    %v1558 = vperm.slane %v1550, %v1557
    %v1559 = vrot.slane %v1546, 4
    %v1560 = vsel %vm176, %v1559, %v1534
    %v1561 = vrot.slane %v1534, 4
    %v1562 = vsel %vm176, %v1546, %v1561
    %v1564 = vunpack.c.l.s4 1934713408
    %v1565 = vunpack.c.0.s8 %v1564
    %v1566 = vperm.slane %v1560, %v1565
    %v1568 = vunpack.c.l.s4 1934713408
    %v1569 = vunpack.c.0.s8 %v1568
    %v1570 = vperm.slane %v1562, %v1569
    %v1571 = vrot.slane %v1554, 4
    %v1572 = vsel %vm176, 0.0, %v1571
    %v1573 = vrot.slane %v1558, 4
    %v1574 = vsel %vm176, 0.0, %v1573
    %v1575 = vrot.slane %v1566, 4
    %v1576 = vsel %vm176, 0.0, %v1575
    %v1577 = vrot.slane %v1570, 4
    %v1578 = vsel %vm176, 0.0, %v1577
    %v1579 = vsel %vm176, %v1573, %v1554
    %v1581 = vunpack.c.l.s4 1983009808
    %v1582 = vunpack.c.0.s8 %v1581
    %v1583 = vperm.slane %v1579, %v1582
    %v1584 = vrot.slane %v1574, 4
    %v1585 = vsel %vm176, %v1584, %v1572
    %v1587 = vunpack.c.l.s4 1983009808
    %v1588 = vunpack.c.0.s8 %v1587
    %v1589 = vperm.slane %v1585, %v1588
    %v1590 = vsel %vm176, %v1577, %v1566
    %v1592 = vunpack.c.l.s4 1983009808
    %v1593 = vunpack.c.0.s8 %v1592
    %v1594 = vperm.slane %v1590, %v1593
    %v1595 = vrot.slane %v1578, 4
    %v1596 = vsel %vm176, %v1595, %v1576
    %v1598 = vunpack.c.l.s4 1983009808
    %v1599 = vunpack.c.0.s8 %v1598
    %v1600 = vperm.slane %v1596, %v1599
    %v1601 = vrot.slane %v1589, 4
    %v1602 = vsel %vm176, %v1601, %v1583
    %v1603 = vrot.slane %v1583, 4
    %v1604 = vsel %vm176, %v1589, %v1603
    %v1606 = vunpack.c.l.s4 1934713408
    %v1607 = vunpack.c.0.s8 %v1606
    %v1608 = vperm.slane %v1602, %v1607
    %v1610 = vunpack.c.l.s4 1934713408
    %v1611 = vunpack.c.0.s8 %v1610
    %v1612 = vperm.slane %v1604, %v1611
    %v1613 = vrot.slane %v1600, 4
    %v1614 = vsel %vm176, %v1613, %v1594
    %v1615 = vrot.slane %v1594, 4
    %v1616 = vsel %vm176, %v1600, %v1615
    %v1618 = vunpack.c.l.s4 1934713408
    %v1619 = vunpack.c.0.s8 %v1618
    %v1620 = vperm.slane %v1614, %v1619
    %v1622 = vunpack.c.l.s4 1934713408
    %v1623 = vunpack.c.0.s8 %v1622
    %v1624 = vperm.slane %v1616, %v1623
    %v1625 = vrot.slane %v1620, 4
    %v1626 = vsel %vm176, %v1625, %v1608
    %v1627 = vrot.slane %v1608, 4
    %v1628 = vsel %vm176, %v1620, %v1627
    %v1629 = vrot.slane %v1624, 4
    %v1630 = vsel %vm176, %v1629, %v1612
    %v1631 = vrot.slane %v1612, 4
    %v1632 = vsel %vm176, %v1624, %v1631
    %1634 = vrot.lane.b32.xlu0 %v1628, 16
    %v1635 = vpop.permute.xlu0 %1634
    %1638 = vrot.lane.b32.xlu0 %v1630, 32
    %v1639 = vpop.permute.xlu0 %1638
    %1642 = vrot.lane.b32.xlu0 %v1632, 48
    %v1643 = vpop.permute.xlu0 %1642
    %v1645 = vsel %vm528, %v1626, %v1635
    %v1646 = vsel %vm35, %v1645, %v1639
    %v1647 = vsel %vm894, %v1646, %v1643
    %v1649 = vsel %vm896, %v1647, 0
    %1651 = vmatpush.msra.mxu0 0.0
    %1652 = vmatpush.msra.mxu0 0.0
    %1653 = vmatpush.msra.mxu0 0.0
    %1654 = vmatpush.msra.mxu0 0.0
    %1655 = vmatpush.msra.mxu0 0.0
    %1656 = vmatpush.msra.mxu0 0.0
    %1657 = vmatpush.msra.mxu0 0.0
    %1658 = vmatpush.msra.mxu0 0.0
    %1659 = vmatpush.msra.mxu0 %v164
    %1660 = vmatpush.msra.mxu0 %v163
    %1661 = vmatpush.msra.mxu0 %v162
    %1662 = vmatpush.msra.mxu0 %v161
    %1663 = vmatpush.msra.mxu0 %v160
    %1664 = vmatpush.msra.mxu0 %v159
    %1665 = vmatpush.msra.mxu0 %v158
    %1666 = vmatpush.msra.mxu0 %v157
    %1667 = vmatmul.f32.gmra.mxu0 %v1649
    %v1668 = vpop.f32.mrf.mxu0
    %v1669 = vadd.f32 0.0, %v1668
    %1670 = vdwg.mxu0
    %s1671 = scalar_lea.vmem [#allocation5], 8
    %1672 = vst.msk [vmem:[%s1671] sm:$0xff] %vm35, %v1669
    // Predicated region
    $region22: #{tpu_custom_call.1} parent=1 // pred_check
      _
    $region23: #{tpu_custom_call.1} parent=1 // pred_check_branch
      %1674 = sbr.rel (0) target = $region25
    $region24: #{tpu_custom_call.1} parent=1 // pred_region
      %1676 = vsyncadd [#allocation4], 0
      %s1677 = sshll.u32 [#allocation5], 4
      %s1678 = int_to_ptr.vmem [resolvable:$true] %s1677
      %s1679 = sshll.u32 %s4, 4
      %s1680 = int_to_ptr.hbm [resolvable:$true] %s1679
      %1685 = dma.vmem_to_hbm [thread:$0]  %s1678, 256, %s1680, [#allocation4], 128, 128, 8
    $region25: #{tpu_custom_call.1} parent=1 // pred_fallthru
      _
    // Predicated region
    $region26: #{tpu_custom_call.1} parent=1 // pred_check
      _
    $region27: #{tpu_custom_call.1} parent=1 // pred_check_branch
      %1687 = sbr.rel (0) target = $region29
    $region28: #{tpu_custom_call.1} parent=1 // pred_region
      %1689 = dma.done [#allocation4], 256
    $region29: #{tpu_custom_call.1} parent=1 // pred_fallthru
      _
    %1690 = vsyncpa [#allocation3], 1
    %1691 = vsyncpa [#allocation4], 1

</llo_original>
